<compile_context>
chip_gen: v7x
topology: tpu7x:2x2x1
jax: 0.10.0
libtpu: 0.0.40
codegen_flags: <defaults>
</compile_context>

<pallas_src>
import functools
import math

import jax
import jax.numpy as jnp
from jax.experimental import pallas as pl
from jax.experimental.pallas import tpu as pltpu

NEG_INF = -1e30


def _flash_attn_kernel(q_ref, k_ref, v_ref, o_ref,
                       m_sc, l_sc, acc_sc,
                       *, softmax_scale, causal, block_q, block_k,
                       num_heads, head_dim):
    qi = pl.program_id(1)
    ki = pl.program_id(2)

    @pl.when(ki == 0)
    def _init():
        m_sc[...] = jnp.full_like(m_sc, -jnp.inf)
        l_sc[...] = jnp.zeros_like(l_sc)
        acc_sc[...] = jnp.zeros_like(acc_sc)

    def compute():
        q = q_ref[0]   # (block_q, H*D)  bf16/fp16, fed straight to the MXU
        k = k_ref[0]   # (block_k, H*D)
        v = v_ref[0]   # (block_k, H*D)

        if causal:
            # Mask built once per grid step, shared by all heads.
            q_pos = qi * block_q + jax.lax.broadcasted_iota(
                jnp.int32, (block_q, block_k), 0)
            k_pos = ki * block_k + jax.lax.broadcasted_iota(
                jnp.int32, (block_q, block_k), 1)
            keep = q_pos >= k_pos

        qk_dims = (((1,), (1,)), ((), ()))   # contract D of both; no K transpose
        pv_dims = (((1,), (0,)), ((), ()))   # ordinary (q,k) x (k,d) matmul

        for h in range(num_heads):
            lo = h * head_dim
            hi = lo + head_dim
            # bf16 x bf16 -> fp32 accumulation on the MXU (no fp32 upcast).
            s = jax.lax.dot_general(q[:, lo:hi], k[:, lo:hi], qk_dims,
                                    preferred_element_type=jnp.float32)
            s = s * softmax_scale
            if causal:
                s = jnp.where(keep, s, NEG_INF)

            m_prev = m_sc[h]                                   # (block_q, 1)
            m_new = jnp.maximum(m_prev, s.max(axis=-1, keepdims=True))
            alpha = jnp.exp(m_prev - m_new)
            p = jnp.exp(s - m_new)

            l_sc[h] = alpha * l_sc[h] + p.sum(axis=-1, keepdims=True)
            acc_sc[h] = alpha * acc_sc[h] + jax.lax.dot_general(
                p.astype(v.dtype), v[:, lo:hi], pv_dims,
                preferred_element_type=jnp.float32)
            m_sc[h] = m_new

    if causal:
        # Skip key blocks that lie entirely above the causal diagonal.
        @pl.when(ki * block_k <= qi * block_q + block_q - 1)
        def _():
            compute()
    else:
        compute()

    @pl.when(ki == pl.num_programs(2) - 1)
    def _finalize():
        for h in range(num_heads):
            lo = h * head_dim
            inv_l = pl.reciprocal(l_sc[h], approx=True)
            o_ref[0, :, lo:lo + head_dim] = (
                acc_sc[h] * inv_l).astype(o_ref.dtype)


def flash_self_attention(q, k, v, *, causal=False, softmax_scale=None,
                         block_q=128, block_k=128):
    """q, k, v: (B, S, H, D) bf16/fp16.  Returns (B, S, H, D) in input dtype."""
    assert q.dtype in (jnp.float16, jnp.bfloat16), q.dtype
    assert q.shape == k.shape == v.shape, (q.shape, k.shape, v.shape)
    B, S, H, D = q.shape
    scale = softmax_scale if softmax_scale is not None else 1.0 / math.sqrt(D)

    block_q = min(block_q, S)
    block_k = min(block_k, S)
    assert S % block_q == 0 and S % block_k == 0, (S, block_q, block_k)

    # Free reshape (contiguous trailing dims merge): (B, S, H, D) -> (B, S, H*D)
    HD = H * D
    qf = q.reshape(B, S, HD)
    kf = k.reshape(B, S, HD)
    vf = v.reshape(B, S, HD)

    kernel = functools.partial(
        _flash_attn_kernel, softmax_scale=scale, causal=causal,
        block_q=block_q, block_k=block_k, num_heads=H, head_dim=D)

    grid = (B, S // block_q, S // block_k)

    out = pl.pallas_call(
        kernel,
        out_shape=jax.ShapeDtypeStruct((B, S, HD), q.dtype),
        grid_spec=pltpu.PrefetchScalarGridSpec(
            num_scalar_prefetch=0,
            grid=grid,
            in_specs=[
                pl.BlockSpec((1, block_q, HD), lambda b, qi, ki: (b, qi, 0)),
                pl.BlockSpec((1, block_k, HD), lambda b, qi, ki: (b, ki, 0)),
                pl.BlockSpec((1, block_k, HD), lambda b, qi, ki: (b, ki, 0)),
            ],
            out_specs=pl.BlockSpec((1, block_q, HD),
                                   lambda b, qi, ki: (b, qi, 0)),
            scratch_shapes=[
                pltpu.VMEM((H, block_q, 1), jnp.float32),   # running max m
                pltpu.VMEM((H, block_q, 1), jnp.float32),   # running denom l
                pltpu.VMEM((H, block_q, D), jnp.float32),   # output accumulator
            ],
        ),
        compiler_params=pltpu.CompilerParams(
            dimension_semantics=("parallel", "parallel", "arbitrary")),
    )(qf, kf, vf)

    # Free reshape back: (B, S, H*D) -> (B, S, H, D)
    return out.reshape(B, S, H, D)


def _reference_attention(q, k, v, *, causal, softmax_scale):
    B, S, H, D = q.shape
    scale = softmax_scale if softmax_scale is not None else 1.0 / math.sqrt(D)
    qf = q.astype(jnp.float32)
    kf = k.astype(jnp.float32)
    vf = v.astype(jnp.float32)
    s = jnp.einsum("bqhd,bkhd->bhqk", qf, kf) * scale
    if causal:
        mask = jnp.tril(jnp.ones((S, S), dtype=bool))
        s = jnp.where(mask[None, None], s, -jnp.inf)
    p = jax.nn.softmax(s, axis=-1)
    o = jnp.einsum("bhqk,bkhd->bqhd", p, vf)
    return o.astype(q.dtype)


if __name__ == "__main__":
    key = jax.random.PRNGKey(0)
    B, S, H, D = 2, 128, 2, 32   # small shapes consistent with (B, S, H, D)
    kq, kk, kv = jax.random.split(key, 3)
    q = jax.random.normal(kq, (B, S, H, D), dtype=jnp.bfloat16)
    k = jax.random.normal(kk, (B, S, H, D), dtype=jnp.bfloat16)
    v = jax.random.normal(kv, (B, S, H, D), dtype=jnp.bfloat16)

    # non-causal (module default) and causal
    out = flash_self_attention(q, k, v, causal=False)
    out = jax.block_until_ready(out)
    out_c = flash_self_attention(q, k, v, causal=True)
    out_c = jax.block_until_ready(out_c)

    ref = _reference_attention(q, k, v, causal=False, softmax_scale=None)
    ref_c = _reference_attention(q, k, v, causal=True, softmax_scale=None)

    err = jnp.max(jnp.abs(out.astype(jnp.float32) - ref.astype(jnp.float32)))
    err_c = jnp.max(jnp.abs(out_c.astype(jnp.float32) - ref_c.astype(jnp.float32)))
    assert err < 5e-2, f"non-causal mismatch: {err}"
    assert err_c < 5e-2, f"causal mismatch: {err_c}"

    print("KERNEL_OK")
</pallas_src>

<mosaic_0001>
module attributes {stable_mosaic.version = 11 : i64} {
  func.func @_flash_attn_kernel(%arg0: i32, %arg1: i32, %arg2: i32, %arg3: memref<1x128x64xbf16, #tpu.memory_space<vmem>>, %arg4: memref<1x128x64xbf16, #tpu.memory_space<vmem>>, %arg5: memref<1x128x64xbf16, #tpu.memory_space<vmem>>, %arg6: memref<1x128x64xbf16, #tpu.memory_space<vmem>>, %arg7: memref<2x128x1xf32, #tpu.memory_space<vmem>>, %arg8: memref<2x128x1xf32, #tpu.memory_space<vmem>>, %arg9: memref<2x128x32xf32, #tpu.memory_space<vmem>>) attributes {dimension_semantics = [#tpu.dimension_semantics<parallel>, #tpu.dimension_semantics<parallel>, #tpu.dimension_semantics<arbitrary>], iteration_bounds = array<i64: 2, 1, 1>, scalar_prefetch = 0 : i64, scratch_operands = 3 : i64, tpu.core_type = #tpu.core_type<tc>, window_params = [{transform_indices = @transform_0, window_bounds = array<i64: 1, 128, 64>}, {transform_indices = @transform_1, window_bounds = array<i64: 1, 128, 64>}, {transform_indices = @transform_2, window_bounds = array<i64: 1, 128, 64>}, {transform_indices = @transform_3, window_bounds = array<i64: 1, 128, 64>}]} {
    %c0_i32 = arith.constant 0 : i32
    %0 = arith.cmpi eq, %arg2, %c0_i32 : i32
    %1 = arith.extui %0 : i1 to i32
    %c0_i32_0 = arith.constant 0 : i32
    %2 = arith.cmpi ne, %1, %c0_i32_0 : i32
    scf.if %2 {
      %cst_55 = arith.constant 0xFF800000 : f32
      %88 = vector.broadcast %cst_55 : f32 to vector<2x128x1xf32>
      %c0_56 = arith.constant 0 : index
      %c0_57 = arith.constant 0 : index
      %c0_58 = arith.constant 0 : index
      %89 = vector.load %arg7[%c0_56, %c0_57, %c0_58] : memref<2x128x1xf32, #tpu.memory_space<vmem>>, vector<2x128x1xf32>
      tpu.vector_store %arg7[%c0_56, %c0_57, %c0_58], %88 {strides = array<i32>} : memref<2x128x1xf32, #tpu.memory_space<vmem>>, vector<2x128x1xf32>,
      %cst_59 = arith.constant 0.000000e+00 : f32
      %90 = vector.broadcast %cst_59 : f32 to vector<2x128x1xf32>
      %c0_60 = arith.constant 0 : index
      %c0_61 = arith.constant 0 : index
      %c0_62 = arith.constant 0 : index
      %91 = vector.load %arg8[%c0_60, %c0_61, %c0_62] : memref<2x128x1xf32, #tpu.memory_space<vmem>>, vector<2x128x1xf32>
      tpu.vector_store %arg8[%c0_60, %c0_61, %c0_62], %90 {strides = array<i32>} : memref<2x128x1xf32, #tpu.memory_space<vmem>>, vector<2x128x1xf32>,
      %cst_63 = arith.constant 0.000000e+00 : f32
      %92 = vector.broadcast %cst_63 : f32 to vector<2x128x32xf32>
      %c0_64 = arith.constant 0 : index
      %c0_65 = arith.constant 0 : index
      %c0_66 = arith.constant 0 : index
      %93 = vector.load %arg9[%c0_64, %c0_65, %c0_66] : memref<2x128x32xf32, #tpu.memory_space<vmem>>, vector<2x128x32xf32>
      tpu.vector_store %arg9[%c0_64, %c0_65, %c0_66], %92 {strides = array<i32>} : memref<2x128x32xf32, #tpu.memory_space<vmem>>, vector<2x128x32xf32>,
    } else {
    }
    %c0 = arith.constant 0 : index
    %c0_1 = arith.constant 0 : index
    %c0_2 = arith.constant 0 : index
    %3 = vector.load %arg3[%c0, %c0_1, %c0_2] : memref<1x128x64xbf16, #tpu.memory_space<vmem>>, vector<1x128x64xbf16>
    %4 = vector.shape_cast %3 : vector<1x128x64xbf16> to vector<128x64xbf16>
    %c0_3 = arith.constant 0 : index
    %c0_4 = arith.constant 0 : index
    %c0_5 = arith.constant 0 : index
    %5 = vector.load %arg4[%c0_3, %c0_4, %c0_5] : memref<1x128x64xbf16, #tpu.memory_space<vmem>>, vector<1x128x64xbf16>
    %6 = vector.shape_cast %5 : vector<1x128x64xbf16> to vector<128x64xbf16>
    %c0_6 = arith.constant 0 : index
    %c0_7 = arith.constant 0 : index
    %c0_8 = arith.constant 0 : index
    %7 = vector.load %arg5[%c0_6, %c0_7, %c0_8] : memref<1x128x64xbf16, #tpu.memory_space<vmem>>, vector<1x128x64xbf16>
    %8 = vector.shape_cast %7 : vector<1x128x64xbf16> to vector<128x64xbf16>
    %9 = vector.extract_strided_slice %4 {offsets = [0, 0], sizes = [128, 32], strides = [1, 1]} : vector<128x64xbf16> to vector<128x32xbf16>
    %10 = vector.extract_strided_slice %6 {offsets = [0, 0], sizes = [128, 32], strides = [1, 1]} : vector<128x64xbf16> to vector<128x32xbf16>
    %cst = arith.constant dense<0.000000e+00> : vector<128x128xf32>
    %11 = tpu.matmul %9, %10, %cst {dimension_numbers = #tpu.dot_dimension_numbers<[1], [1], [0], [0], [0, 0, 1, 0], [], []>} : vector<128x32xbf16>, vector<128x32xbf16>, vector<128x128xf32> -> vector<128x128xf32>
    %cst_9 = arith.constant 0.176776692 : f32
    %12 = vector.broadcast %cst_9 : f32 to vector<128x128xf32>
    %13 = arith.mulf %11, %12 : vector<128x128xf32>
    %c0_10 = arith.constant 0 : index
    %c0_11 = arith.constant 0 : index
    %c0_12 = arith.constant 0 : index
    %14 = vector.load %arg7[%c0_10, %c0_11, %c0_12] : memref<2x128x1xf32, #tpu.memory_space<vmem>>, vector<1x128x1xf32>
    %15 = vector.shape_cast %14 : vector<1x128x1xf32> to vector<128x1xf32>
    %cst_13 = arith.constant dense<0xFF800000> : vector<128xf32>
    %16 = vector.multi_reduction <maximumf>, %13, %cst_13 [1] : vector<128x128xf32> to vector<128xf32>
    %17 = vector.shape_cast %16 : vector<128xf32> to vector<128x1xf32>
    %18 = arith.maximumf %15, %17 : vector<128x1xf32>
    %19 = arith.subf %15, %18 : vector<128x1xf32>
    %20 = math.exp %19 : vector<128x1xf32>
    %21 = vector.broadcast %18 : vector<128x1xf32> to vector<128x128xf32>
    %22 = arith.subf %13, %21 : vector<128x128xf32>
    %23 = math.exp %22 : vector<128x128xf32>
    %c0_14 = arith.constant 0 : index
    %c0_15 = arith.constant 0 : index
    %c0_16 = arith.constant 0 : index
    %24 = vector.load %arg8[%c0_14, %c0_15, %c0_16] : memref<2x128x1xf32, #tpu.memory_space<vmem>>, vector<1x128x1xf32>
    %25 = vector.shape_cast %24 : vector<1x128x1xf32> to vector<128x1xf32>
    %26 = arith.mulf %20, %25 : vector<128x1xf32>
    %cst_17 = arith.constant dense<0.000000e+00> : vector<128xf32>
    %27 = vector.multi_reduction <add>, %23, %cst_17 [1] : vector<128x128xf32> to vector<128xf32>
    %28 = vector.shape_cast %27 : vector<128xf32> to vector<128x1xf32>
    %29 = arith.addf %26, %28 : vector<128x1xf32>
    %c0_18 = arith.constant 0 : index
    %c0_19 = arith.constant 0 : index
    %c0_20 = arith.constant 0 : index
    %30 = vector.load %arg8[%c0_18, %c0_19, %c0_20] : memref<2x128x1xf32, #tpu.memory_space<vmem>>, vector<1x128x1xf32>
    %31 = vector.shape_cast %30 : vector<1x128x1xf32> to vector<128x1xf32>
    %32 = vector.shape_cast %29 : vector<128x1xf32> to vector<1x128x1xf32>
    tpu.vector_store %arg8[%c0_18, %c0_19, %c0_20], %32 {strides = array<i32>} : memref<2x128x1xf32, #tpu.memory_space<vmem>>, vector<1x128x1xf32>,
    %c0_21 = arith.constant 0 : index
    %c0_22 = arith.constant 0 : index
    %c0_23 = arith.constant 0 : index
    %33 = vector.load %arg9[%c0_21, %c0_22, %c0_23] : memref<2x128x32xf32, #tpu.memory_space<vmem>>, vector<1x128x32xf32>
    %34 = vector.shape_cast %33 : vector<1x128x32xf32> to vector<128x32xf32>
    %35 = vector.broadcast %20 : vector<128x1xf32> to vector<128x32xf32>
    %36 = arith.mulf %35, %34 : vector<128x32xf32>
    %37 = arith.truncf %23 : vector<128x128xf32> to vector<128x128xbf16>
    %38 = vector.extract_strided_slice %8 {offsets = [0, 0], sizes = [128, 32], strides = [1, 1]} : vector<128x64xbf16> to vector<128x32xbf16>
    %cst_24 = arith.constant dense<0.000000e+00> : vector<128x32xf32>
    %39 = tpu.matmul %37, %38, %cst_24 {dimension_numbers = #tpu.dot_dimension_numbers<[1], [0], [0], [1], [0, 0, 1, 1], [], []>} : vector<128x128xbf16>, vector<128x32xbf16>, vector<128x32xf32> -> vector<128x32xf32>
    %40 = arith.addf %36, %39 : vector<128x32xf32>
    %c0_25 = arith.constant 0 : index
    %c0_26 = arith.constant 0 : index
    %c0_27 = arith.constant 0 : index
    %41 = vector.load %arg9[%c0_25, %c0_26, %c0_27] : memref<2x128x32xf32, #tpu.memory_space<vmem>>, vector<1x128x32xf32>
    %42 = vector.shape_cast %41 : vector<1x128x32xf32> to vector<128x32xf32>
    %43 = vector.shape_cast %40 : vector<128x32xf32> to vector<1x128x32xf32>
    tpu.vector_store %arg9[%c0_25, %c0_26, %c0_27], %43 {strides = array<i32>} : memref<2x128x32xf32, #tpu.memory_space<vmem>>, vector<1x128x32xf32>,
    %c0_28 = arith.constant 0 : index
    %c0_29 = arith.constant 0 : index
    %c0_30 = arith.constant 0 : index
    %44 = vector.load %arg7[%c0_28, %c0_29, %c0_30] : memref<2x128x1xf32, #tpu.memory_space<vmem>>, vector<1x128x1xf32>
    %45 = vector.shape_cast %44 : vector<1x128x1xf32> to vector<128x1xf32>
    %46 = vector.shape_cast %18 : vector<128x1xf32> to vector<1x128x1xf32>
    tpu.vector_store %arg7[%c0_28, %c0_29, %c0_30], %46 {strides = array<i32>} : memref<2x128x1xf32, #tpu.memory_space<vmem>>, vector<1x128x1xf32>,
    %47 = vector.extract_strided_slice %4 {offsets = [0, 32], sizes = [128, 32], strides = [1, 1]} : vector<128x64xbf16> to vector<128x32xbf16>
    %48 = vector.extract_strided_slice %6 {offsets = [0, 32], sizes = [128, 32], strides = [1, 1]} : vector<128x64xbf16> to vector<128x32xbf16>
    %cst_31 = arith.constant dense<0.000000e+00> : vector<128x128xf32>
    %49 = tpu.matmul %47, %48, %cst_31 {dimension_numbers = #tpu.dot_dimension_numbers<[1], [1], [0], [0], [0, 0, 1, 0], [], []>} : vector<128x32xbf16>, vector<128x32xbf16>, vector<128x128xf32> -> vector<128x128xf32>
    %cst_32 = arith.constant 0.176776692 : f32
    %50 = vector.broadcast %cst_32 : f32 to vector<128x128xf32>
    %51 = arith.mulf %49, %50 : vector<128x128xf32>
    %c1 = arith.constant 1 : index
    %c0_33 = arith.constant 0 : index
    %c0_34 = arith.constant 0 : index
    %52 = vector.load %arg7[%c1, %c0_33, %c0_34] : memref<2x128x1xf32, #tpu.memory_space<vmem>>, vector<1x128x1xf32>
    %53 = vector.shape_cast %52 : vector<1x128x1xf32> to vector<128x1xf32>
    %cst_35 = arith.constant dense<0xFF800000> : vector<128xf32>
    %54 = vector.multi_reduction <maximumf>, %51, %cst_35 [1] : vector<128x128xf32> to vector<128xf32>
    %55 = vector.shape_cast %54 : vector<128xf32> to vector<128x1xf32>
    %56 = arith.maximumf %53, %55 : vector<128x1xf32>
    %57 = arith.subf %53, %56 : vector<128x1xf32>
    %58 = math.exp %57 : vector<128x1xf32>
    %59 = vector.broadcast %56 : vector<128x1xf32> to vector<128x128xf32>
    %60 = arith.subf %51, %59 : vector<128x128xf32>
    %61 = math.exp %60 : vector<128x128xf32>
    %c1_36 = arith.constant 1 : index
    %c0_37 = arith.constant 0 : index
    %c0_38 = arith.constant 0 : index
    %62 = vector.load %arg8[%c1_36, %c0_37, %c0_38] : memref<2x128x1xf32, #tpu.memory_space<vmem>>, vector<1x128x1xf32>
    %63 = vector.shape_cast %62 : vector<1x128x1xf32> to vector<128x1xf32>
    %64 = arith.mulf %58, %63 : vector<128x1xf32>
    %cst_39 = arith.constant dense<0.000000e+00> : vector<128xf32>
    %65 = vector.multi_reduction <add>, %61, %cst_39 [1] : vector<128x128xf32> to vector<128xf32>
    %66 = vector.shape_cast %65 : vector<128xf32> to vector<128x1xf32>
    %67 = arith.addf %64, %66 : vector<128x1xf32>
    %c1_40 = arith.constant 1 : index
    %c0_41 = arith.constant 0 : index
    %c0_42 = arith.constant 0 : index
    %68 = vector.load %arg8[%c1_40, %c0_41, %c0_42] : memref<2x128x1xf32, #tpu.memory_space<vmem>>, vector<1x128x1xf32>
    %69 = vector.shape_cast %68 : vector<1x128x1xf32> to vector<128x1xf32>
    %70 = vector.shape_cast %67 : vector<128x1xf32> to vector<1x128x1xf32>
    tpu.vector_store %arg8[%c1_40, %c0_41, %c0_42], %70 {strides = array<i32>} : memref<2x128x1xf32, #tpu.memory_space<vmem>>, vector<1x128x1xf32>,
    %c1_43 = arith.constant 1 : index
    %c0_44 = arith.constant 0 : index
    %c0_45 = arith.constant 0 : index
    %71 = vector.load %arg9[%c1_43, %c0_44, %c0_45] : memref<2x128x32xf32, #tpu.memory_space<vmem>>, vector<1x128x32xf32>
    %72 = vector.shape_cast %71 : vector<1x128x32xf32> to vector<128x32xf32>
    %73 = vector.broadcast %58 : vector<128x1xf32> to vector<128x32xf32>
    %74 = arith.mulf %73, %72 : vector<128x32xf32>
    %75 = arith.truncf %61 : vector<128x128xf32> to vector<128x128xbf16>
    %76 = vector.extract_strided_slice %8 {offsets = [0, 32], sizes = [128, 32], strides = [1, 1]} : vector<128x64xbf16> to vector<128x32xbf16>
    %cst_46 = arith.constant dense<0.000000e+00> : vector<128x32xf32>
    %77 = tpu.matmul %75, %76, %cst_46 {dimension_numbers = #tpu.dot_dimension_numbers<[1], [0], [0], [1], [0, 0, 1, 1], [], []>} : vector<128x128xbf16>, vector<128x32xbf16>, vector<128x32xf32> -> vector<128x32xf32>
    %78 = arith.addf %74, %77 : vector<128x32xf32>
    %c1_47 = arith.constant 1 : index
    %c0_48 = arith.constant 0 : index
    %c0_49 = arith.constant 0 : index
    %79 = vector.load %arg9[%c1_47, %c0_48, %c0_49] : memref<2x128x32xf32, #tpu.memory_space<vmem>>, vector<1x128x32xf32>
    %80 = vector.shape_cast %79 : vector<1x128x32xf32> to vector<128x32xf32>
    %81 = vector.shape_cast %78 : vector<128x32xf32> to vector<1x128x32xf32>
    tpu.vector_store %arg9[%c1_47, %c0_48, %c0_49], %81 {strides = array<i32>} : memref<2x128x32xf32, #tpu.memory_space<vmem>>, vector<1x128x32xf32>,
    %c1_50 = arith.constant 1 : index
    %c0_51 = arith.constant 0 : index
    %c0_52 = arith.constant 0 : index
    %82 = vector.load %arg7[%c1_50, %c0_51, %c0_52] : memref<2x128x1xf32, #tpu.memory_space<vmem>>, vector<1x128x1xf32>
    %83 = vector.shape_cast %82 : vector<1x128x1xf32> to vector<128x1xf32>
    %84 = vector.shape_cast %56 : vector<128x1xf32> to vector<1x128x1xf32>
    tpu.vector_store %arg7[%c1_50, %c0_51, %c0_52], %84 {strides = array<i32>} : memref<2x128x1xf32, #tpu.memory_space<vmem>>, vector<1x128x1xf32>,
    %c0_i32_53 = arith.constant 0 : i32
    %85 = arith.cmpi eq, %arg2, %c0_i32_53 : i32
    %86 = arith.extui %85 : i1 to i32
    %c0_i32_54 = arith.constant 0 : i32
    %87 = arith.cmpi ne, %86, %c0_i32_54 : i32
    scf.if %87 {
      %c0_55 = arith.constant 0 : index
      %c0_56 = arith.constant 0 : index
      %c0_57 = arith.constant 0 : index
      %88 = vector.load %arg8[%c0_55, %c0_56, %c0_57] : memref<2x128x1xf32, #tpu.memory_space<vmem>>, vector<1x128x1xf32>
      %89 = vector.shape_cast %88 : vector<1x128x1xf32> to vector<128x1xf32>
      %90 = tpu.reciprocal %89 {approx = true} : vector<128x1xf32> -> vector<128x1xf32>
      %c0_58 = arith.constant 0 : index
      %c0_59 = arith.constant 0 : index
      %c0_60 = arith.constant 0 : index
      %91 = vector.load %arg9[%c0_58, %c0_59, %c0_60] : memref<2x128x32xf32, #tpu.memory_space<vmem>>, vector<1x128x32xf32>
      %92 = vector.shape_cast %91 : vector<1x128x32xf32> to vector<128x32xf32>
      %93 = vector.broadcast %90 : vector<128x1xf32> to vector<128x32xf32>
      %94 = arith.mulf %92, %93 : vector<128x32xf32>
      %95 = arith.truncf %94 : vector<128x32xf32> to vector<128x32xbf16>
      %c0_61 = arith.constant 0 : index
      %c0_62 = arith.constant 0 : index
      %c0_63 = arith.constant 0 : index
      %96 = vector.load %arg6[%c0_61, %c0_62, %c0_63] : memref<1x128x64xbf16, #tpu.memory_space<vmem>>, vector<1x128x32xbf16>
      %97 = vector.shape_cast %96 : vector<1x128x32xbf16> to vector<128x32xbf16>
      %98 = vector.shape_cast %95 : vector<128x32xbf16> to vector<1x128x32xbf16>
      tpu.vector_store %arg6[%c0_61, %c0_62, %c0_63], %98 {strides = array<i32>} : memref<1x128x64xbf16, #tpu.memory_space<vmem>>, vector<1x128x32xbf16>,
      %c1_64 = arith.constant 1 : index
      %c0_65 = arith.constant 0 : index
      %c0_66 = arith.constant 0 : index
      %99 = vector.load %arg8[%c1_64, %c0_65, %c0_66] : memref<2x128x1xf32, #tpu.memory_space<vmem>>, vector<1x128x1xf32>
      %100 = vector.shape_cast %99 : vector<1x128x1xf32> to vector<128x1xf32>
      %101 = tpu.reciprocal %100 {approx = true} : vector<128x1xf32> -> vector<128x1xf32>
      %c1_67 = arith.constant 1 : index
      %c0_68 = arith.constant 0 : index
      %c0_69 = arith.constant 0 : index
      %102 = vector.load %arg9[%c1_67, %c0_68, %c0_69] : memref<2x128x32xf32, #tpu.memory_space<vmem>>, vector<1x128x32xf32>
      %103 = vector.shape_cast %102 : vector<1x128x32xf32> to vector<128x32xf32>
      %104 = vector.broadcast %101 : vector<128x1xf32> to vector<128x32xf32>
      %105 = arith.mulf %103, %104 : vector<128x32xf32>
      %106 = arith.truncf %105 : vector<128x32xf32> to vector<128x32xbf16>
      %c0_70 = arith.constant 0 : index
      %c0_71 = arith.constant 0 : index
      %c32 = arith.constant 32 : index
      %107 = vector.load %arg6[%c0_70, %c0_71, %c32] : memref<1x128x64xbf16, #tpu.memory_space<vmem>>, vector<1x128x32xbf16>
      %108 = vector.shape_cast %107 : vector<1x128x32xbf16> to vector<128x32xbf16>
      %109 = vector.shape_cast %106 : vector<128x32xbf16> to vector<1x128x32xbf16>
      tpu.vector_store %arg6[%c0_70, %c0_71, %c32], %109 {strides = array<i32>} : memref<1x128x64xbf16, #tpu.memory_space<vmem>>, vector<1x128x32xbf16>,
    } else {
    }
    return
  }
  func.func @transform_0(%arg0: i32, %arg1: i32, %arg2: i32) -> (i32, i32, i32) {
    %c0_i32 = arith.constant 0 : i32
    %c0_i32_0 = arith.constant 0 : i32
    return %arg0, %arg1, %c0_i32 : i32, i32, i32
  }
  func.func @transform_1(%arg0: i32, %arg1: i32, %arg2: i32) -> (i32, i32, i32) {
    %c0_i32 = arith.constant 0 : i32
    %c0_i32_0 = arith.constant 0 : i32
    return %arg0, %arg2, %c0_i32 : i32, i32, i32
  }
  func.func @transform_2(%arg0: i32, %arg1: i32, %arg2: i32) -> (i32, i32, i32) {
    %c0_i32 = arith.constant 0 : i32
    %c0_i32_0 = arith.constant 0 : i32
    return %arg0, %arg2, %c0_i32 : i32, i32, i32
  }
  func.func @transform_3(%arg0: i32, %arg1: i32, %arg2: i32) -> (i32, i32, i32) {
    %c0_i32 = arith.constant 0 : i32
    %c0_i32_0 = arith.constant 0 : i32
    return %arg0, %arg1, %c0_i32 : i32, i32, i32
  }
}

</mosaic_0001>

<llo_original>
// kernel: tpu_custom_call.1
$region0: #{tpu_custom_call.1}
  #allocation0 [shape = 'u32[]', space=smem, size = 0x4, offset = 0x4, fixed_abs, tag = 'smem constant byte address 0x4 - core index']
  #allocation1 [shape = 'u32[144,128]{1,0:T(1,128)}', space=vmem, size = 0x12000, scoped, tag = 'internal scratch']
  #allocation2 [shape = 'f32[2,128,1]{2,1,0:T(8,128)}', space=vmem, size = 0x20000, scoped, tag = 'scratch operand']
  #allocation3 [shape = 'f32[2,128,1]{2,1,0:T(8,128)}', space=vmem, size = 0x20000, scoped, tag = 'scratch operand']
  #allocation4 [shape = 'f32[2,128,32]{2,1,0:T(8,128)}', space=vmem, size = 0x20000, scoped, tag = 'scratch operand']
  %s0 = inlined_call_operand.vmem [shape: bf16[2,128,64], index: 0, kind: input, shape index: {}]
  %s1 = inlined_call_operand.vmem [shape: bf16[2,128,64], index: 1, kind: input, shape index: {}]
  %s2 = inlined_call_operand.vmem [shape: bf16[2,128,64], index: 2, kind: input, shape index: {}]
  %s3 = inlined_call_operand.vmem [shape: bf16[2,128,64], index: 3, kind: output, shape index: {}]
  %s4 = sld [smem:[#allocation0]]
  $region53: #{tpu_custom_call.1} parent=0
    _
  %s6 = ssub.s32 1, %s4
  %s7 = scalar_select 0, %s6, %s4
  loop: start=0, step=1, limit=4
  $region2: #{tpu_custom_call.1} parent=0 // loop_pre_header
    _
  $region3: #{tpu_custom_call.1} parent=0 // loop_header
    %s9 = sphi 0, %s13
    %p10 = scmp.ge.s32.totalorder %s9, 4
    %s16 = sphi 0, %s35
    %s17 = sphi 0, %s31
    %s18 = sphi 0, %s27
    %s19 = sphi 0, %s16
    %s20 = sphi 0, %s17
    %s21 = sphi 0, %s18
    %s22 = sphi 0, %s19
    %s23 = sphi 0, %s20
    %s24 = sphi 0, %s21
    %s40 = sphi 0, %s42
    %s43 = sphi 0, %s40
    %s44 = sphi 0, %s43
    %s60 = sphi 0, %s44
    %s68 = sphi 0, %s70
    %s71 = sphi 0, %s68
    %s72 = sphi 0, %s71
    %s88 = sphi 0, %s72
    %s96 = sphi 0, %s98
    %s99 = sphi 0, %s96
    %s100 = sphi 0, %s99
    %s116 = sphi 0, %s100
    %s124 = sphi 0, %s126
    %s127 = sphi 0, %s124
    %s128 = sphi 0, %s127
    %s144 = sphi 0, %s128
  $region4: #{tpu_custom_call.1} parent=0 // loop_header_branch
    %12 = sbr.rel (%p10) target = $region8
  $region5: #{tpu_custom_call.1} parent=0 // loop_body
    %s14 = ssub.s32 %s9, 1
    %s15 = ssub.s32 %s9, 2
    %s25 = sadd.s32 1, %s18
    %p26 = scmp.ge.s32.totalorder %s25, 1
    %s27 = scalar_select %p26, 0, %s25
    %s28 = sadd.s32 1, %s17
    %s29 = scalar_select %p26, %s28, %s17
    %p30 = scmp.ge.s32.totalorder %s29, 1
    %s31 = scalar_select %p30, 0, %s29
    %s32 = sadd.s32 1, %s16
    %s33 = scalar_select %p30, %s32, %s16
    %p34 = scmp.ge.s32.totalorder %s33, 2
    %s35 = scalar_select %p34, 0, %s33
    %s36 = ssub.s32 %s16, %s35
    %s37 = ssub.s32 %s17, %s31
    %s38 = sor.u32 %s36, %s37
    %p39 = scmp.eq.s32.totalorder %s38, 0
    %s41 = sadd.s32 %s40, 1
    %s42 = scalar_select %p39, %s40, %s41
    %p45 = pneg %p39
    %p46 = scmp.eq.s32.totalorder %s9, 1
    %p47 = por %p45, %p46
    %p48 = scmp.ne.s32.totalorder %s40, %s43
    %p49 = scmp.eq.s32.totalorder %s9, 0
    %p50 = por %p48, %p49
    %p51 = scmp.ne.s32.totalorder %s40, %s43
    %p52 = scmp.eq.s32.totalorder %s14, 1
    %p53 = por %p51, %p52
    %p54 = scmp.ne.s32.totalorder %s43, %s44
    %p55 = scmp.eq.s32.totalorder %s14, 0
    %p56 = por %p54, %p55
    %p57 = scmp.ne.s32.totalorder %s43, %s44
    %p58 = scmp.eq.s32.totalorder %s15, 1
    %p59 = por %p57, %p58
    %p61 = scmp.ne.s32.totalorder %s44, %s60
    %p62 = scmp.eq.s32.totalorder %s15, 0
    %p63 = por %p61, %p62
    %s64 = ssub.s32 %s16, %s35
    %s65 = ssub.s32 %s18, %s27
    %s66 = sor.u32 %s64, %s65
    %p67 = scmp.eq.s32.totalorder %s66, 0
    %s69 = sadd.s32 %s68, 1
    %s70 = scalar_select %p67, %s68, %s69
    %p73 = pneg %p67
    %p74 = scmp.eq.s32.totalorder %s9, 1
    %p75 = por %p73, %p74
    %p76 = scmp.ne.s32.totalorder %s68, %s71
    %p77 = scmp.eq.s32.totalorder %s9, 0
    %p78 = por %p76, %p77
    %p79 = scmp.ne.s32.totalorder %s68, %s71
    %p80 = scmp.eq.s32.totalorder %s14, 1
    %p81 = por %p79, %p80
    %p82 = scmp.ne.s32.totalorder %s71, %s72
    %p83 = scmp.eq.s32.totalorder %s14, 0
    %p84 = por %p82, %p83
    %p85 = scmp.ne.s32.totalorder %s71, %s72
    %p86 = scmp.eq.s32.totalorder %s15, 1
    %p87 = por %p85, %p86
    %p89 = scmp.ne.s32.totalorder %s72, %s88
    %p90 = scmp.eq.s32.totalorder %s15, 0
    %p91 = por %p89, %p90
    %s92 = ssub.s32 %s16, %s35
    %s93 = ssub.s32 %s18, %s27
    %s94 = sor.u32 %s92, %s93
    %p95 = scmp.eq.s32.totalorder %s94, 0
    %s97 = sadd.s32 %s96, 1
    %s98 = scalar_select %p95, %s96, %s97
    %p101 = pneg %p95
    %p102 = scmp.eq.s32.totalorder %s9, 1
    %p103 = por %p101, %p102
    %p104 = scmp.ne.s32.totalorder %s96, %s99
    %p105 = scmp.eq.s32.totalorder %s9, 0
    %p106 = por %p104, %p105
    %p107 = scmp.ne.s32.totalorder %s96, %s99
    %p108 = scmp.eq.s32.totalorder %s14, 1
    %p109 = por %p107, %p108
    %p110 = scmp.ne.s32.totalorder %s99, %s100
    %p111 = scmp.eq.s32.totalorder %s14, 0
    %p112 = por %p110, %p111
    %p113 = scmp.ne.s32.totalorder %s99, %s100
    %p114 = scmp.eq.s32.totalorder %s15, 1
    %p115 = por %p113, %p114
    %p117 = scmp.ne.s32.totalorder %s100, %s116
    %p118 = scmp.eq.s32.totalorder %s15, 0
    %p119 = por %p117, %p118
    %s120 = ssub.s32 %s16, %s35
    %s121 = ssub.s32 %s17, %s31
    %s122 = sor.u32 %s120, %s121
    %p123 = scmp.eq.s32.totalorder %s122, 0
    %s125 = sadd.s32 %s124, 1
    %s126 = scalar_select %p123, %s124, %s125
    %p129 = pneg %p123
    %p130 = scmp.eq.s32.totalorder %s9, 1
    %p131 = por %p129, %p130
    %p132 = scmp.ne.s32.totalorder %s124, %s127
    %p133 = scmp.eq.s32.totalorder %s9, 0
    %p134 = por %p132, %p133
    %p135 = scmp.ne.s32.totalorder %s124, %s127
    %p136 = scmp.eq.s32.totalorder %s14, 1
    %p137 = por %p135, %p136
    %p138 = scmp.ne.s32.totalorder %s127, %s128
    %p139 = scmp.eq.s32.totalorder %s14, 0
    %p140 = por %p138, %p139
    %p141 = scmp.ne.s32.totalorder %s127, %s128
    %p142 = scmp.eq.s32.totalorder %s15, 1
    %p143 = por %p141, %p142
    %p145 = scmp.ne.s32.totalorder %s128, %s144
    %p146 = scmp.eq.s32.totalorder %s15, 0
    %p147 = por %p145, %p146
    %p148 = scmp.le.s32.totalorder 1, %s9
    %p149 = scmp.lt.s32.totalorder %s9, 3
    %p150 = pnand %p148, %p149
    %p151 = pneg %p150
    // Predicated region
    $region9: #{tpu_custom_call.1} parent=5 // pred_check
      _
    $region10: #{tpu_custom_call.1} parent=5 // pred_check_branch
      %153 = sbr.rel (%p150) target = $region12
    $region11: #{tpu_custom_call.1} parent=5 // pred_region
      %s154 = ssub.s32 %s9, 1
    $region12: #{tpu_custom_call.1} parent=5 // pred_fallthru
      _
    %p155 = scmp.lt.s32.totalorder %s9, 2
    // Predicated region
    $region13: #{tpu_custom_call.1} parent=5 // pred_check
      %p156 = pneg %p155
    $region14: #{tpu_custom_call.1} parent=5 // pred_check_branch
      %158 = sbr.rel (%p156) target = $region16
    $region15: #{tpu_custom_call.1} parent=5 // pred_region
      // Predicated region
      $region17: #{tpu_custom_call.1} parent=15 // pred_check
        %p159 = pneg %p50
      $region18: #{tpu_custom_call.1} parent=15 // pred_check_branch
        %161 = sbr.rel (%p159) target = $region20
      $region19: #{tpu_custom_call.1} parent=15 // pred_region
        %s162 = smul.u32 16, %s17
        %p163 = scmp.lt.s32.totalorder %s16, 1
        %s164 = scalar_select %p163, %s16, 1
        %p165 = scmp.lt.s32.totalorder %s162, 15
        %s166 = scalar_select %p165, %s162, 15
        %s167 = smul.addr %s164, 16
        %s168 = sadd.s32 %s166, %s167
        %s169 = smul.addr %s168, 4
        %s170 = scalar_lea.vmem %s0, %s169
        %s171 = smul.u32 16, %s17
      $region20: #{tpu_custom_call.1} parent=15 // pred_fallthru
        _
      // Predicated region
      $region21: #{tpu_custom_call.1} parent=15 // pred_check
        %p172 = pneg %p78
      $region22: #{tpu_custom_call.1} parent=15 // pred_check_branch
        %174 = sbr.rel (%p172) target = $region24
      $region23: #{tpu_custom_call.1} parent=15 // pred_region
        %s175 = smul.u32 16, %s18
        %p176 = scmp.lt.s32.totalorder %s16, 1
        %s177 = scalar_select %p176, %s16, 1
        %p178 = scmp.lt.s32.totalorder %s175, 15
        %s179 = scalar_select %p178, %s175, 15
        %s180 = smul.addr %s177, 16
        %s181 = sadd.s32 %s179, %s180
        %s182 = smul.addr %s181, 4
        %s183 = scalar_lea.vmem %s1, %s182
        %s184 = smul.u32 16, %s18
      $region24: #{tpu_custom_call.1} parent=15 // pred_fallthru
        _
      // Predicated region
      $region25: #{tpu_custom_call.1} parent=15 // pred_check
        %p185 = pneg %p106
      $region26: #{tpu_custom_call.1} parent=15 // pred_check_branch
        %187 = sbr.rel (%p185) target = $region28
      $region27: #{tpu_custom_call.1} parent=15 // pred_region
        %s188 = smul.u32 16, %s18
        %p189 = scmp.lt.s32.totalorder %s16, 1
        %s190 = scalar_select %p189, %s16, 1
        %p191 = scmp.lt.s32.totalorder %s188, 15
        %s192 = scalar_select %p191, %s188, 15
        %s193 = smul.addr %s190, 16
        %s194 = sadd.s32 %s192, %s193
        %s195 = smul.addr %s194, 4
        %s196 = scalar_lea.vmem %s2, %s195
        %s197 = smul.u32 16, %s18
      $region28: #{tpu_custom_call.1} parent=15 // pred_fallthru
        _
    $region16: #{tpu_custom_call.1} parent=5 // pred_fallthru
      _
    %p198 = scmp.le.s32.totalorder 1, %s9
    %p199 = scmp.lt.s32.totalorder %s9, 3
    %p200 = pnand %p198, %p199
    %p201 = pneg %p200
    // Predicated region
    $region29: #{tpu_custom_call.1} parent=5 // pred_check
      _
    $region30: #{tpu_custom_call.1} parent=5 // pred_check_branch
      %203 = sbr.rel (%p200) target = $region32
    $region31: #{tpu_custom_call.1} parent=5 // pred_region
      %s204 = ssub.s32 %s9, 1
      %s205 = smul.u32 16, %s20
      %p206 = scmp.lt.s32.totalorder %s19, 1
      %s207 = scalar_select %p206, %s19, 1
      %p208 = scmp.lt.s32.totalorder %s205, 15
      %s209 = scalar_select %p208, %s205, 15
      %s210 = smul.addr %s207, 16
      %s211 = sadd.s32 %s209, %s210
      %s212 = smul.addr %s211, 4
      %s213 = scalar_lea.vmem %s0, %s212
      %p214 = pneg %p56
      %p215 = pneg %p53
      %s216 = smul.u32 16, %s21
      %p217 = scmp.lt.s32.totalorder %s19, 1
      %s218 = scalar_select %p217, %s19, 1
      %p219 = scmp.lt.s32.totalorder %s216, 15
      %s220 = scalar_select %p219, %s216, 15
      %s221 = smul.addr %s218, 16
      %s222 = sadd.s32 %s220, %s221
      %s223 = smul.addr %s222, 4
      %s224 = scalar_lea.vmem %s1, %s223
      %p225 = pneg %p84
      %p226 = pneg %p81
      %s227 = smul.u32 16, %s21
      %p228 = scmp.lt.s32.totalorder %s19, 1
      %s229 = scalar_select %p228, %s19, 1
      %p230 = scmp.lt.s32.totalorder %s227, 15
      %s231 = scalar_select %p230, %s227, 15
      %s232 = smul.addr %s229, 16
      %s233 = sadd.s32 %s231, %s232
      %s234 = smul.addr %s233, 4
      %s235 = scalar_lea.vmem %s2, %s234
      %p236 = pneg %p112
      %p237 = pneg %p109
      %p238 = pneg %p140
      %p239 = pneg %p137
      %s240 = smul.u32 16, %s20
      %p241 = scmp.lt.s32.totalorder %s19, 1
      %s242 = scalar_select %p241, %s19, 1
      %p243 = scmp.lt.s32.totalorder %s240, 15
      %s244 = scalar_select %p243, %s240, 15
      %s245 = smul.addr %s242, 16
      %s246 = sadd.s32 %s244, %s245
      %s247 = smul.addr %s246, 4
      %s248 = scalar_lea.vmem %s3, %s247
      %s249 = smul.u32 16, %s20
      %p250 = scmp.lt.s32.totalorder %s19, 1
      %s251 = scalar_select %p250, %s19, 1
      %p252 = scmp.lt.s32.totalorder %s249, 15
      %s253 = scalar_select %p252, %s249, 15
      %s254 = smul.addr %s251, 16
      %s255 = sadd.s32 %s253, %s254
      %s256 = smul.addr %s255, 4
      %s257 = scalar_lea.vmem %s0, %s256
      %s258 = smul.u32 16, %s20
      %s259 = smul.u32 16, %s21
      %p260 = scmp.lt.s32.totalorder %s19, 1
      %s261 = scalar_select %p260, %s19, 1
      %p262 = scmp.lt.s32.totalorder %s259, 15
      %s263 = scalar_select %p262, %s259, 15
      %s264 = smul.addr %s261, 16
      %s265 = sadd.s32 %s263, %s264
      %s266 = smul.addr %s265, 4
      %s267 = scalar_lea.vmem %s1, %s266
      %s268 = smul.u32 16, %s21
      %s269 = smul.u32 16, %s21
      %p270 = scmp.lt.s32.totalorder %s19, 1
      %s271 = scalar_select %p270, %s19, 1
      %p272 = scmp.lt.s32.totalorder %s269, 15
      %s273 = scalar_select %p272, %s269, 15
      %s274 = smul.addr %s271, 16
      %s275 = sadd.s32 %s273, %s274
      %s276 = smul.addr %s275, 4
      %s277 = scalar_lea.vmem %s2, %s276
      %s278 = smul.u32 16, %s21
      %s279 = smul.u32 16, %s20
      %p280 = scmp.lt.s32.totalorder %s19, 1
      %s281 = scalar_select %p280, %s19, 1
      %p282 = scmp.lt.s32.totalorder %s279, 15
      %s283 = scalar_select %p282, %s279, 15
      %s284 = smul.addr %s281, 16
      %s285 = sadd.s32 %s283, %s284
      %s286 = smul.addr %s285, 4
      %s287 = scalar_lea.vmem %s3, %s286
      %s288 = smul.u32 16, %s20
      %p290 = scmp.eq.s32.totalorder %s21, 0
      // Predicated region
      $region33: #{tpu_custom_call.1} parent=31 // pred_check
        %p291 = pneg %p290
      $region34: #{tpu_custom_call.1} parent=31 // pred_check_branch
        %293 = sbr.rel (%p291) target = $region36
      $region35: #{tpu_custom_call.1} parent=31 // pred_region
        %vm294 = vcmask 7168
        %295 = vst.msk [vmem:[#allocation2] sm:$0xff] %vm294, -inf
        %296 = vst.msk [vmem:[#allocation2 + $0x8] sm:$0xff] %vm294, -inf
        %297 = vst.msk [vmem:[#allocation2 + $0x10] sm:$0xff] %vm294, -inf
        %298 = vst.msk [vmem:[#allocation2 + $0x18] sm:$0xff] %vm294, -inf
        %299 = vst.msk [vmem:[#allocation2 + $0x20] sm:$0xff] %vm294, -inf
        %300 = vst.msk [vmem:[#allocation2 + $0x28] sm:$0xff] %vm294, -inf
        %301 = vst.msk [vmem:[#allocation2 + $0x30] sm:$0xff] %vm294, -inf
        %302 = vst.msk [vmem:[#allocation2 + $0x38] sm:$0xff] %vm294, -inf
        %303 = vst.msk [vmem:[#allocation2 + $0x40] sm:$0xff] %vm294, -inf
        %304 = vst.msk [vmem:[#allocation2 + $0x48] sm:$0xff] %vm294, -inf
        %305 = vst.msk [vmem:[#allocation2 + $0x50] sm:$0xff] %vm294, -inf
        %306 = vst.msk [vmem:[#allocation2 + $0x58] sm:$0xff] %vm294, -inf
        %307 = vst.msk [vmem:[#allocation2 + $0x60] sm:$0xff] %vm294, -inf
        %308 = vst.msk [vmem:[#allocation2 + $0x68] sm:$0xff] %vm294, -inf
        %309 = vst.msk [vmem:[#allocation2 + $0x70] sm:$0xff] %vm294, -inf
        %310 = vst.msk [vmem:[#allocation2 + $0x78] sm:$0xff] %vm294, -inf
        %311 = vst.msk [vmem:[#allocation2 + $0x80] sm:$0xff] %vm294, -inf
        %312 = vst.msk [vmem:[#allocation2 + $0x88] sm:$0xff] %vm294, -inf
        %313 = vst.msk [vmem:[#allocation2 + $0x90] sm:$0xff] %vm294, -inf
        %314 = vst.msk [vmem:[#allocation2 + $0x98] sm:$0xff] %vm294, -inf
        %315 = vst.msk [vmem:[#allocation2 + $0xa0] sm:$0xff] %vm294, -inf
        %316 = vst.msk [vmem:[#allocation2 + $0xa8] sm:$0xff] %vm294, -inf
        %317 = vst.msk [vmem:[#allocation2 + $0xb0] sm:$0xff] %vm294, -inf
        %318 = vst.msk [vmem:[#allocation2 + $0xb8] sm:$0xff] %vm294, -inf
        %319 = vst.msk [vmem:[#allocation2 + $0xc0] sm:$0xff] %vm294, -inf
        %320 = vst.msk [vmem:[#allocation2 + $0xc8] sm:$0xff] %vm294, -inf
        %321 = vst.msk [vmem:[#allocation2 + $0xd0] sm:$0xff] %vm294, -inf
        %322 = vst.msk [vmem:[#allocation2 + $0xd8] sm:$0xff] %vm294, -inf
        %323 = vst.msk [vmem:[#allocation2 + $0xe0] sm:$0xff] %vm294, -inf
        %324 = vst.msk [vmem:[#allocation2 + $0xe8] sm:$0xff] %vm294, -inf
        %325 = vst.msk [vmem:[#allocation2 + $0xf0] sm:$0xff] %vm294, -inf
        %326 = vst.msk [vmem:[#allocation2 + $0xf8] sm:$0xff] %vm294, -inf
        %327 = vst.msk [vmem:[#allocation3] sm:$0xff] %vm294, 0.0
        %328 = vst.msk [vmem:[#allocation3 + $0x8] sm:$0xff] %vm294, 0.0
        %329 = vst.msk [vmem:[#allocation3 + $0x10] sm:$0xff] %vm294, 0.0
        %330 = vst.msk [vmem:[#allocation3 + $0x18] sm:$0xff] %vm294, 0.0
        %331 = vst.msk [vmem:[#allocation3 + $0x20] sm:$0xff] %vm294, 0.0
        %332 = vst.msk [vmem:[#allocation3 + $0x28] sm:$0xff] %vm294, 0.0
        %333 = vst.msk [vmem:[#allocation3 + $0x30] sm:$0xff] %vm294, 0.0
        %334 = vst.msk [vmem:[#allocation3 + $0x38] sm:$0xff] %vm294, 0.0
        %335 = vst.msk [vmem:[#allocation3 + $0x40] sm:$0xff] %vm294, 0.0
        %336 = vst.msk [vmem:[#allocation3 + $0x48] sm:$0xff] %vm294, 0.0
        %337 = vst.msk [vmem:[#allocation3 + $0x50] sm:$0xff] %vm294, 0.0
        %338 = vst.msk [vmem:[#allocation3 + $0x58] sm:$0xff] %vm294, 0.0
        %339 = vst.msk [vmem:[#allocation3 + $0x60] sm:$0xff] %vm294, 0.0
        %340 = vst.msk [vmem:[#allocation3 + $0x68] sm:$0xff] %vm294, 0.0
        %341 = vst.msk [vmem:[#allocation3 + $0x70] sm:$0xff] %vm294, 0.0
        %342 = vst.msk [vmem:[#allocation3 + $0x78] sm:$0xff] %vm294, 0.0
        %343 = vst.msk [vmem:[#allocation3 + $0x80] sm:$0xff] %vm294, 0.0
        %344 = vst.msk [vmem:[#allocation3 + $0x88] sm:$0xff] %vm294, 0.0
        %345 = vst.msk [vmem:[#allocation3 + $0x90] sm:$0xff] %vm294, 0.0
        %346 = vst.msk [vmem:[#allocation3 + $0x98] sm:$0xff] %vm294, 0.0
        %347 = vst.msk [vmem:[#allocation3 + $0xa0] sm:$0xff] %vm294, 0.0
        %348 = vst.msk [vmem:[#allocation3 + $0xa8] sm:$0xff] %vm294, 0.0
        %349 = vst.msk [vmem:[#allocation3 + $0xb0] sm:$0xff] %vm294, 0.0
        %350 = vst.msk [vmem:[#allocation3 + $0xb8] sm:$0xff] %vm294, 0.0
        %351 = vst.msk [vmem:[#allocation3 + $0xc0] sm:$0xff] %vm294, 0.0
        %352 = vst.msk [vmem:[#allocation3 + $0xc8] sm:$0xff] %vm294, 0.0
        %353 = vst.msk [vmem:[#allocation3 + $0xd0] sm:$0xff] %vm294, 0.0
        %354 = vst.msk [vmem:[#allocation3 + $0xd8] sm:$0xff] %vm294, 0.0
        %355 = vst.msk [vmem:[#allocation3 + $0xe0] sm:$0xff] %vm294, 0.0
        %356 = vst.msk [vmem:[#allocation3 + $0xe8] sm:$0xff] %vm294, 0.0
        %357 = vst.msk [vmem:[#allocation3 + $0xf0] sm:$0xff] %vm294, 0.0
        %358 = vst.msk [vmem:[#allocation3 + $0xf8] sm:$0xff] %vm294, 0.0
        %vm359 = vcmask 261120
        %360 = vst.msk [vmem:[#allocation4] sm:$0xff] %vm359, 0.0
        %361 = vst.msk [vmem:[#allocation4 + $0x8] sm:$0xff] %vm359, 0.0
        %362 = vst.msk [vmem:[#allocation4 + $0x10] sm:$0xff] %vm359, 0.0
        %363 = vst.msk [vmem:[#allocation4 + $0x18] sm:$0xff] %vm359, 0.0
        %364 = vst.msk [vmem:[#allocation4 + $0x20] sm:$0xff] %vm359, 0.0
        %365 = vst.msk [vmem:[#allocation4 + $0x28] sm:$0xff] %vm359, 0.0
        %366 = vst.msk [vmem:[#allocation4 + $0x30] sm:$0xff] %vm359, 0.0
        %367 = vst.msk [vmem:[#allocation4 + $0x38] sm:$0xff] %vm359, 0.0
        %368 = vst.msk [vmem:[#allocation4 + $0x40] sm:$0xff] %vm359, 0.0
        %369 = vst.msk [vmem:[#allocation4 + $0x48] sm:$0xff] %vm359, 0.0
        %370 = vst.msk [vmem:[#allocation4 + $0x50] sm:$0xff] %vm359, 0.0
        %371 = vst.msk [vmem:[#allocation4 + $0x58] sm:$0xff] %vm359, 0.0
        %372 = vst.msk [vmem:[#allocation4 + $0x60] sm:$0xff] %vm359, 0.0
        %373 = vst.msk [vmem:[#allocation4 + $0x68] sm:$0xff] %vm359, 0.0
        %374 = vst.msk [vmem:[#allocation4 + $0x70] sm:$0xff] %vm359, 0.0
        %375 = vst.msk [vmem:[#allocation4 + $0x78] sm:$0xff] %vm359, 0.0
        %376 = vst.msk [vmem:[#allocation4 + $0x80] sm:$0xff] %vm359, 0.0
        %377 = vst.msk [vmem:[#allocation4 + $0x88] sm:$0xff] %vm359, 0.0
        %378 = vst.msk [vmem:[#allocation4 + $0x90] sm:$0xff] %vm359, 0.0
        %379 = vst.msk [vmem:[#allocation4 + $0x98] sm:$0xff] %vm359, 0.0
        %380 = vst.msk [vmem:[#allocation4 + $0xa0] sm:$0xff] %vm359, 0.0
        %381 = vst.msk [vmem:[#allocation4 + $0xa8] sm:$0xff] %vm359, 0.0
        %382 = vst.msk [vmem:[#allocation4 + $0xb0] sm:$0xff] %vm359, 0.0
        %383 = vst.msk [vmem:[#allocation4 + $0xb8] sm:$0xff] %vm359, 0.0
        %384 = vst.msk [vmem:[#allocation4 + $0xc0] sm:$0xff] %vm359, 0.0
        %385 = vst.msk [vmem:[#allocation4 + $0xc8] sm:$0xff] %vm359, 0.0
        %386 = vst.msk [vmem:[#allocation4 + $0xd0] sm:$0xff] %vm359, 0.0
        %387 = vst.msk [vmem:[#allocation4 + $0xd8] sm:$0xff] %vm359, 0.0
        %388 = vst.msk [vmem:[#allocation4 + $0xe0] sm:$0xff] %vm359, 0.0
        %389 = vst.msk [vmem:[#allocation4 + $0xe8] sm:$0xff] %vm359, 0.0
        %390 = vst.msk [vmem:[#allocation4 + $0xf0] sm:$0xff] %vm359, 0.0
        %391 = vst.msk [vmem:[#allocation4 + $0xf8] sm:$0xff] %vm359, 0.0
      $region36: #{tpu_custom_call.1} parent=31 // pred_fallthru
        _
      %v392 = vld [vmem:[%s257] sm:$0xf]
      %v393 = vld [vmem:[%s257 + $0x4] sm:$0xf]
      %v394 = vld [vmem:[%s257 + $0x8] sm:$0xf]
      %v395 = vld [vmem:[%s257 + $0xc] sm:$0xf]
      %v396 = vld [vmem:[%s257 + $0x10] sm:$0xf]
      %v397 = vld [vmem:[%s257 + $0x14] sm:$0xf]
      %v398 = vld [vmem:[%s257 + $0x18] sm:$0xf]
      %v399 = vld [vmem:[%s257 + $0x1c] sm:$0xf]
      %v400 = vld [vmem:[%s257 + $0x20] sm:$0xf]
      %v401 = vld [vmem:[%s257 + $0x24] sm:$0xf]
      %v402 = vld [vmem:[%s257 + $0x28] sm:$0xf]
      %v403 = vld [vmem:[%s257 + $0x2c] sm:$0xf]
      %v404 = vld [vmem:[%s257 + $0x30] sm:$0xf]
      %v405 = vld [vmem:[%s257 + $0x34] sm:$0xf]
      %v406 = vld [vmem:[%s257 + $0x38] sm:$0xf]
      %v407 = vld [vmem:[%s257 + $0x3c] sm:$0xf]
      %v408 = vld [vmem:[%s267] sm:$0xf]
      %v409 = vld [vmem:[%s267 + $0x4] sm:$0xf]
      %v410 = vld [vmem:[%s267 + $0x8] sm:$0xf]
      %v411 = vld [vmem:[%s267 + $0xc] sm:$0xf]
      %v412 = vld [vmem:[%s267 + $0x10] sm:$0xf]
      %v413 = vld [vmem:[%s267 + $0x14] sm:$0xf]
      %v414 = vld [vmem:[%s267 + $0x18] sm:$0xf]
      %v415 = vld [vmem:[%s267 + $0x1c] sm:$0xf]
      %v416 = vld [vmem:[%s267 + $0x20] sm:$0xf]
      %v417 = vld [vmem:[%s267 + $0x24] sm:$0xf]
      %v418 = vld [vmem:[%s267 + $0x28] sm:$0xf]
      %v419 = vld [vmem:[%s267 + $0x2c] sm:$0xf]
      %v420 = vld [vmem:[%s267 + $0x30] sm:$0xf]
      %v421 = vld [vmem:[%s267 + $0x34] sm:$0xf]
      %v422 = vld [vmem:[%s267 + $0x38] sm:$0xf]
      %v423 = vld [vmem:[%s267 + $0x3c] sm:$0xf]
      %v424 = vld [vmem:[%s277] sm:$0xf]
      %v425 = vld [vmem:[%s277 + $0x4] sm:$0xf]
      %v426 = vld [vmem:[%s277 + $0x8] sm:$0xf]
      %v427 = vld [vmem:[%s277 + $0xc] sm:$0xf]
      %v428 = vld [vmem:[%s277 + $0x10] sm:$0xf]
      %v429 = vld [vmem:[%s277 + $0x14] sm:$0xf]
      %v430 = vld [vmem:[%s277 + $0x18] sm:$0xf]
      %v431 = vld [vmem:[%s277 + $0x1c] sm:$0xf]
      %v432 = vld [vmem:[%s277 + $0x20] sm:$0xf]
      %v433 = vld [vmem:[%s277 + $0x24] sm:$0xf]
      %v434 = vld [vmem:[%s277 + $0x28] sm:$0xf]
      %v435 = vld [vmem:[%s277 + $0x2c] sm:$0xf]
      %v436 = vld [vmem:[%s277 + $0x30] sm:$0xf]
      %v437 = vld [vmem:[%s277 + $0x34] sm:$0xf]
      %v438 = vld [vmem:[%s277 + $0x38] sm:$0xf]
      %v439 = vld [vmem:[%s277 + $0x3c] sm:$0xf]
      %v456 = vunpack.c.l.b16 %v392
      %v457 = vunpack.c.l.b16 %v393
      %v458 = vunpack.c.l.b16 %v394
      %v459 = vunpack.c.l.b16 %v395
      %v460 = vunpack.c.l.b16 %v396
      %v461 = vunpack.c.l.b16 %v397
      %v462 = vunpack.c.l.b16 %v398
      %v463 = vunpack.c.l.b16 %v399
      %v464 = vunpack.c.l.b16 %v400
      %v465 = vunpack.c.l.b16 %v401
      %v466 = vunpack.c.l.b16 %v402
      %v467 = vunpack.c.l.b16 %v403
      %v468 = vunpack.c.l.b16 %v404
      %v469 = vunpack.c.l.b16 %v405
      %v470 = vunpack.c.l.b16 %v406
      %v471 = vunpack.c.l.b16 %v407
      %v472 = vpack.c.b16 %v457, %v456
      %v473 = vpack.c.b16 %v459, %v458
      %v474 = vpack.c.b16 %v461, %v460
      %v475 = vpack.c.b16 %v463, %v462
      %v476 = vpack.c.b16 %v465, %v464
      %v477 = vpack.c.b16 %v467, %v466
      %v478 = vpack.c.b16 %v469, %v468
      %v479 = vpack.c.b16 %v471, %v470
      %v496 = vunpack.c.l.b16 %v408
      %v497 = vunpack.c.l.b16 %v409
      %v498 = vunpack.c.l.b16 %v410
      %v499 = vunpack.c.l.b16 %v411
      %v500 = vunpack.c.l.b16 %v412
      %v501 = vunpack.c.l.b16 %v413
      %v502 = vunpack.c.l.b16 %v414
      %v503 = vunpack.c.l.b16 %v415
      %v504 = vunpack.c.l.b16 %v416
      %v505 = vunpack.c.l.b16 %v417
      %v506 = vunpack.c.l.b16 %v418
      %v507 = vunpack.c.l.b16 %v419
      %v508 = vunpack.c.l.b16 %v420
      %v509 = vunpack.c.l.b16 %v421
      %v510 = vunpack.c.l.b16 %v422
      %v511 = vunpack.c.l.b16 %v423
      %v512 = vpack.c.b16 %v497, %v496
      %v513 = vpack.c.b16 %v499, %v498
      %v514 = vpack.c.b16 %v501, %v500
      %v515 = vpack.c.b16 %v503, %v502
      %v516 = vpack.c.b16 %v505, %v504
      %v517 = vpack.c.b16 %v507, %v506
      %v518 = vpack.c.b16 %v509, %v508
      %v519 = vpack.c.b16 %v511, %v510
      %vm520 = vcmask 261120
      %v522 = vsel %vm520, %v472, 0
      %v525 = vsel %vm520, %v473, 0
      %v528 = vsel %vm520, %v474, 0
      %v531 = vsel %vm520, %v475, 0
      %v534 = vsel %vm520, %v476, 0
      %v537 = vsel %vm520, %v477, 0
      %v540 = vsel %vm520, %v478, 0
      %v543 = vsel %vm520, %v479, 0
      %v546 = vsel %vm520, %v512, 0
      %v549 = vsel %vm520, %v513, 0
      %v552 = vsel %vm520, %v514, 0
      %v555 = vsel %vm520, %v515, 0
      %v558 = vsel %vm520, %v516, 0
      %v561 = vsel %vm520, %v517, 0
      %v564 = vsel %vm520, %v518, 0
      %v567 = vsel %vm520, %v519, 0
      %569 = vmatprep.subr.bf16.mxu0 0
      %570 = vmatpush1.bf16.xpose.msra.mxu0 %v546
      %571 = vmatprep.subr.bf16.mxu0 0
      %572 = vmatpush1.bf16.xpose.msra.mxu0 %v549
      %573 = vmatprep.subr.bf16.mxu0 0
      %574 = vmatpush1.bf16.xpose.msra.mxu0 %v552
      %575 = vmatprep.subr.bf16.mxu0 0
      %576 = vmatpush1.bf16.xpose.msra.mxu0 %v555
      %577 = vmatprep.subr.bf16.mxu0 0
      %578 = vmatpush1.bf16.xpose.msra.mxu0 %v558
      %579 = vmatprep.subr.bf16.mxu0 0
      %580 = vmatpush1.bf16.xpose.msra.mxu0 %v561
      %581 = vmatprep.subr.bf16.mxu0 0
      %582 = vmatpush1.bf16.xpose.msra.mxu0 %v564
      %583 = vmatprep.subr.bf16.mxu0 0
      %584 = vmatpush1.bf16.xpose.msra.mxu0 %v567
      %585 = vmatprep.subr.bf16.mxu0 0
      %586 = vmatpush1.bf16.xpose.msra.mxu0 0
      %587 = vmatprep.subr.bf16.mxu0 0
      %588 = vmatpush1.bf16.xpose.msra.mxu0 0
      %589 = vmatprep.subr.bf16.mxu0 0
      %590 = vmatpush1.bf16.xpose.msra.mxu0 0
      %591 = vmatprep.subr.bf16.mxu0 0
      %592 = vmatpush1.bf16.xpose.msra.mxu0 0
      %593 = vmatprep.subr.bf16.mxu0 0
      %594 = vmatpush1.bf16.xpose.msra.mxu0 0
      %595 = vmatprep.subr.bf16.mxu0 0
      %596 = vmatpush1.bf16.xpose.msra.mxu0 0
      %597 = vmatprep.subr.bf16.mxu0 0
      %598 = vmatpush1.bf16.xpose.msra.mxu0 0
      %599 = vmatprep.subr.bf16.mxu0 0
      %600 = vmatpush1.bf16.xpose.msra.mxu0 0
      %601 = vmatprep.mubr.bf16.mxu0 0
      %602 = vmatmul.mubr.bf16.gmra.mrb[0].mxu0 %v522
      %v603 = vpop.f32.mrb[0].mxu0
      %v604 = vadd.f32 0.0, %v603
      %v605 = vpop.f32.mrb[0].mxu0
      %v606 = vpop.f32.mrb[0].mxu0
      %v607 = vadd.f32 0.0, %v606
      %v608 = vpop.f32.mrb[0].mxu0
      %609 = vmatprep.mubr.bf16.mxu0 0
      %610 = vmatmul.mubr.bf16.gmra.mrb[0].mxu0 %v525
      %v611 = vpop.f32.mrb[0].mxu0
      %v612 = vadd.f32 0.0, %v611
      %v613 = vpop.f32.mrb[0].mxu0
      %v614 = vpop.f32.mrb[0].mxu0
      %v615 = vadd.f32 0.0, %v614
      %v616 = vpop.f32.mrb[0].mxu0
      %617 = vmatprep.mubr.bf16.mxu0 0
      %618 = vmatmul.mubr.bf16.gmra.mrb[0].mxu0 %v528
      %v619 = vpop.f32.mrb[0].mxu0
      %v620 = vadd.f32 0.0, %v619
      %v621 = vpop.f32.mrb[0].mxu0
      %v622 = vpop.f32.mrb[0].mxu0
      %v623 = vadd.f32 0.0, %v622
      %v624 = vpop.f32.mrb[0].mxu0
      %625 = vmatprep.mubr.bf16.mxu0 0
      %626 = vmatmul.mubr.bf16.gmra.mrb[0].mxu0 %v531
      %v627 = vpop.f32.mrb[0].mxu0
      %v628 = vadd.f32 0.0, %v627
      %v629 = vpop.f32.mrb[0].mxu0
      %v630 = vpop.f32.mrb[0].mxu0
      %v631 = vadd.f32 0.0, %v630
      %v632 = vpop.f32.mrb[0].mxu0
      %633 = vmatprep.mubr.bf16.mxu0 0
      %634 = vmatmul.mubr.bf16.gmra.mrb[0].mxu0 %v534
      %v635 = vpop.f32.mrb[0].mxu0
      %v636 = vadd.f32 0.0, %v635
      %v637 = vpop.f32.mrb[0].mxu0
      %v638 = vpop.f32.mrb[0].mxu0
      %v639 = vadd.f32 0.0, %v638
      %v640 = vpop.f32.mrb[0].mxu0
      %641 = vmatprep.mubr.bf16.mxu0 0
      %642 = vmatmul.mubr.bf16.gmra.mrb[0].mxu0 %v537
      %v643 = vpop.f32.mrb[0].mxu0
      %v644 = vadd.f32 0.0, %v643
      %v645 = vpop.f32.mrb[0].mxu0
      %v646 = vpop.f32.mrb[0].mxu0
      %v647 = vadd.f32 0.0, %v646
      %v648 = vpop.f32.mrb[0].mxu0
      %649 = vmatprep.mubr.bf16.mxu0 0
      %650 = vmatmul.mubr.bf16.gmra.mrb[0].mxu0 %v540
      %v651 = vpop.f32.mrb[0].mxu0
      %v652 = vadd.f32 0.0, %v651
      %v653 = vpop.f32.mrb[0].mxu0
      %v654 = vpop.f32.mrb[0].mxu0
      %v655 = vadd.f32 0.0, %v654
      %v656 = vpop.f32.mrb[0].mxu0
      %657 = vmatprep.mubr.bf16.mxu0 0
      %658 = vmatmul.mubr.bf16.gmra.mrb[0].mxu0 %v543
      %v659 = vpop.f32.mrb[0].mxu0
      %v660 = vadd.f32 0.0, %v659
      %v661 = vpop.f32.mrb[0].mxu0
      %v662 = vpop.f32.mrb[0].mxu0
      %v663 = vadd.f32 0.0, %v662
      %v664 = vpop.f32.mrb[0].mxu0
      %665 = vdwg.mxu0
      %v666 = vmul.f32 %v604, 0.17677669
      %v667 = vmul.f32 %v607, 0.17677669
      %v668 = vmul.f32 %v612, 0.17677669
      %v669 = vmul.f32 %v615, 0.17677669
      %v670 = vmul.f32 %v620, 0.17677669
      %v671 = vmul.f32 %v623, 0.17677669
      %v672 = vmul.f32 %v628, 0.17677669
      %v673 = vmul.f32 %v631, 0.17677669
      %v674 = vmul.f32 %v636, 0.17677669
      %v675 = vmul.f32 %v639, 0.17677669
      %v676 = vmul.f32 %v644, 0.17677669
      %v677 = vmul.f32 %v647, 0.17677669
      %v678 = vmul.f32 %v652, 0.17677669
      %v679 = vmul.f32 %v655, 0.17677669
      %v680 = vmul.f32 %v660, 0.17677669
      %v681 = vmul.f32 %v663, 0.17677669
      %v682 = vld [vmem:[#allocation2] sm:$0xff]
      %v683 = vld [vmem:[#allocation2 + $0x8] sm:$0xff]
      %v684 = vld [vmem:[#allocation2 + $0x10] sm:$0xff]
      %v685 = vld [vmem:[#allocation2 + $0x18] sm:$0xff]
      %v686 = vld [vmem:[#allocation2 + $0x20] sm:$0xff]
      %v687 = vld [vmem:[#allocation2 + $0x28] sm:$0xff]
      %v688 = vld [vmem:[#allocation2 + $0x30] sm:$0xff]
      %v689 = vld [vmem:[#allocation2 + $0x38] sm:$0xff]
      %v690 = vld [vmem:[#allocation2 + $0x40] sm:$0xff]
      %v691 = vld [vmem:[#allocation2 + $0x48] sm:$0xff]
      %v692 = vld [vmem:[#allocation2 + $0x50] sm:$0xff]
      %v693 = vld [vmem:[#allocation2 + $0x58] sm:$0xff]
      %v694 = vld [vmem:[#allocation2 + $0x60] sm:$0xff]
      %v695 = vld [vmem:[#allocation2 + $0x68] sm:$0xff]
      %v696 = vld [vmem:[#allocation2 + $0x70] sm:$0xff]
      %v697 = vld [vmem:[#allocation2 + $0x78] sm:$0xff]
      %698 = vmax.xlane.f32.xlu0 %v666
      %v699 = vpop.xlane.xlu0 %698
      %700 = vmax.xlane.f32.xlu0 %v667
      %v701 = vpop.xlane.xlu0 %700
      %702 = vmax.xlane.f32.xlu0 %v668
      %v703 = vpop.xlane.xlu0 %702
      %704 = vmax.xlane.f32.xlu0 %v669
      %v705 = vpop.xlane.xlu0 %704
      %706 = vmax.xlane.f32.xlu0 %v670
      %v707 = vpop.xlane.xlu0 %706
      %708 = vmax.xlane.f32.xlu0 %v671
      %v709 = vpop.xlane.xlu0 %708
      %710 = vmax.xlane.f32.xlu0 %v672
      %v711 = vpop.xlane.xlu0 %710
      %712 = vmax.xlane.f32.xlu0 %v673
      %v713 = vpop.xlane.xlu0 %712
      %714 = vmax.xlane.f32.xlu0 %v674
      %v715 = vpop.xlane.xlu0 %714
      %716 = vmax.xlane.f32.xlu0 %v675
      %v717 = vpop.xlane.xlu0 %716
      %718 = vmax.xlane.f32.xlu0 %v676
      %v719 = vpop.xlane.xlu0 %718
      %720 = vmax.xlane.f32.xlu0 %v677
      %v721 = vpop.xlane.xlu0 %720
      %722 = vmax.xlane.f32.xlu0 %v678
      %v723 = vpop.xlane.xlu0 %722
      %724 = vmax.xlane.f32.xlu0 %v679
      %v725 = vpop.xlane.xlu0 %724
      %726 = vmax.xlane.f32.xlu0 %v680
      %v727 = vpop.xlane.xlu0 %726
      %728 = vmax.xlane.f32.xlu0 %v681
      %v729 = vpop.xlane.xlu0 %728
      %v730 = vmax.f32 %v682, %v699
      %v731 = vmax.f32 %v683, %v701
      %v732 = vmax.f32 %v684, %v703
      %v733 = vmax.f32 %v685, %v705
      %v734 = vmax.f32 %v686, %v707
      %v735 = vmax.f32 %v687, %v709
      %v736 = vmax.f32 %v688, %v711
      %v737 = vmax.f32 %v689, %v713
      %v738 = vmax.f32 %v690, %v715
      %v739 = vmax.f32 %v691, %v717
      %v740 = vmax.f32 %v692, %v719
      %v741 = vmax.f32 %v693, %v721
      %v742 = vmax.f32 %v694, %v723
      %v743 = vmax.f32 %v695, %v725
      %v744 = vmax.f32 %v696, %v727
      %v745 = vmax.f32 %v697, %v729
      %v746 = vsub.f32 %v682, %v730
      %v747 = vsub.f32 %v683, %v731
      %v748 = vsub.f32 %v684, %v732
      %v749 = vsub.f32 %v685, %v733
      %v750 = vsub.f32 %v686, %v734
      %v751 = vsub.f32 %v687, %v735
      %v752 = vsub.f32 %v688, %v736
      %v753 = vsub.f32 %v689, %v737
      %v754 = vsub.f32 %v690, %v738
      %v755 = vsub.f32 %v691, %v739
      %v756 = vsub.f32 %v692, %v740
      %v757 = vsub.f32 %v693, %v741
      %v758 = vsub.f32 %v694, %v742
      %v759 = vsub.f32 %v695, %v743
      %v760 = vsub.f32 %v696, %v744
      %v761 = vsub.f32 %v697, %v745
      %v762 = vmul.f32 %v746, 1.442695
      %v763 = vpow.pop %v762
      %v764 = vmul.f32 %v747, 1.442695
      %v765 = vpow.pop %v764
      %v766 = vmul.f32 %v748, 1.442695
      %v767 = vpow.pop %v766
      %v768 = vmul.f32 %v749, 1.442695
      %v769 = vpow.pop %v768
      %v770 = vmul.f32 %v750, 1.442695
      %v771 = vpow.pop %v770
      %v772 = vmul.f32 %v751, 1.442695
      %v773 = vpow.pop %v772
      %v774 = vmul.f32 %v752, 1.442695
      %v775 = vpow.pop %v774
      %v776 = vmul.f32 %v753, 1.442695
      %v777 = vpow.pop %v776
      %v778 = vmul.f32 %v754, 1.442695
      %v779 = vpow.pop %v778
      %v780 = vmul.f32 %v755, 1.442695
      %v781 = vpow.pop %v780
      %v782 = vmul.f32 %v756, 1.442695
      %v783 = vpow.pop %v782
      %v784 = vmul.f32 %v757, 1.442695
      %v785 = vpow.pop %v784
      %v786 = vmul.f32 %v758, 1.442695
      %v787 = vpow.pop %v786
      %v788 = vmul.f32 %v759, 1.442695
      %v789 = vpow.pop %v788
      %v790 = vmul.f32 %v760, 1.442695
      %v791 = vpow.pop %v790
      %v792 = vmul.f32 %v761, 1.442695
      %v793 = vpow.pop %v792
      %795 = vset.pattern.permute.xlu0 0
      %796 = vperm.xlu0 %795, %v730
      %v797 = vpop.permute.xlu0 %796
      %800 = vset.pattern.permute.xlu0 0
      %801 = vperm.xlu0 %800, %v731
      %v802 = vpop.permute.xlu0 %801
      %805 = vset.pattern.permute.xlu0 0
      %806 = vperm.xlu0 %805, %v732
      %v807 = vpop.permute.xlu0 %806
      %810 = vset.pattern.permute.xlu0 0
      %811 = vperm.xlu0 %810, %v733
      %v812 = vpop.permute.xlu0 %811
      %815 = vset.pattern.permute.xlu0 0
      %816 = vperm.xlu0 %815, %v734
      %v817 = vpop.permute.xlu0 %816
      %820 = vset.pattern.permute.xlu0 0
      %821 = vperm.xlu0 %820, %v735
      %v822 = vpop.permute.xlu0 %821
      %825 = vset.pattern.permute.xlu0 0
      %826 = vperm.xlu0 %825, %v736
      %v827 = vpop.permute.xlu0 %826
      %830 = vset.pattern.permute.xlu0 0
      %831 = vperm.xlu0 %830, %v737
      %v832 = vpop.permute.xlu0 %831
      %835 = vset.pattern.permute.xlu0 0
      %836 = vperm.xlu0 %835, %v738
      %v837 = vpop.permute.xlu0 %836
      %840 = vset.pattern.permute.xlu0 0
      %841 = vperm.xlu0 %840, %v739
      %v842 = vpop.permute.xlu0 %841
      %845 = vset.pattern.permute.xlu0 0
      %846 = vperm.xlu0 %845, %v740
      %v847 = vpop.permute.xlu0 %846
      %850 = vset.pattern.permute.xlu0 0
      %851 = vperm.xlu0 %850, %v741
      %v852 = vpop.permute.xlu0 %851
      %855 = vset.pattern.permute.xlu0 0
      %856 = vperm.xlu0 %855, %v742
      %v857 = vpop.permute.xlu0 %856
      %860 = vset.pattern.permute.xlu0 0
      %861 = vperm.xlu0 %860, %v743
      %v862 = vpop.permute.xlu0 %861
      %865 = vset.pattern.permute.xlu0 0
      %866 = vperm.xlu0 %865, %v744
      %v867 = vpop.permute.xlu0 %866
      %870 = vset.pattern.permute.xlu0 0
      %871 = vperm.xlu0 %870, %v745
      %v872 = vpop.permute.xlu0 %871
      %v874 = vsub.f32 %v666, %v797
      %v875 = vsub.f32 %v667, %v802
      %v876 = vsub.f32 %v668, %v807
      %v877 = vsub.f32 %v669, %v812
      %v878 = vsub.f32 %v670, %v817
      %v879 = vsub.f32 %v671, %v822
      %v880 = vsub.f32 %v672, %v827
      %v881 = vsub.f32 %v673, %v832
      %v882 = vsub.f32 %v674, %v837
      %v883 = vsub.f32 %v675, %v842
      %v884 = vsub.f32 %v676, %v847
      %v885 = vsub.f32 %v677, %v852
      %v886 = vsub.f32 %v678, %v857
      %v887 = vsub.f32 %v679, %v862
      %v888 = vsub.f32 %v680, %v867
      %v889 = vsub.f32 %v681, %v872
      %v890 = vmul.f32 %v874, 1.442695
      %v891 = vpow.pop %v890
      %v892 = vmul.f32 %v875, 1.442695
      %v893 = vpow.pop %v892
      %v894 = vmul.f32 %v876, 1.442695
      %v895 = vpow.pop %v894
      %v896 = vmul.f32 %v877, 1.442695
      %v897 = vpow.pop %v896
      %v898 = vmul.f32 %v878, 1.442695
      %v899 = vpow.pop %v898
      %v900 = vmul.f32 %v879, 1.442695
      %v901 = vpow.pop %v900
      %v902 = vmul.f32 %v880, 1.442695
      %v903 = vpow.pop %v902
      %v904 = vmul.f32 %v881, 1.442695
      %v905 = vpow.pop %v904
      %v906 = vmul.f32 %v882, 1.442695
      %v907 = vpow.pop %v906
      %v908 = vmul.f32 %v883, 1.442695
      %v909 = vpow.pop %v908
      %v910 = vmul.f32 %v884, 1.442695
      %v911 = vpow.pop %v910
      %v912 = vmul.f32 %v885, 1.442695
      %v913 = vpow.pop %v912
      %v914 = vmul.f32 %v886, 1.442695
      %v915 = vpow.pop %v914
      %v916 = vmul.f32 %v887, 1.442695
      %v917 = vpow.pop %v916
      %v918 = vmul.f32 %v888, 1.442695
      %v919 = vpow.pop %v918
      %v920 = vmul.f32 %v889, 1.442695
      %v921 = vpow.pop %v920
      %v922 = vld [vmem:[#allocation3] sm:$0xff]
      %v923 = vld [vmem:[#allocation3 + $0x8] sm:$0xff]
      %v924 = vld [vmem:[#allocation3 + $0x10] sm:$0xff]
      %v925 = vld [vmem:[#allocation3 + $0x18] sm:$0xff]
      %v926 = vld [vmem:[#allocation3 + $0x20] sm:$0xff]
      %v927 = vld [vmem:[#allocation3 + $0x28] sm:$0xff]
      %v928 = vld [vmem:[#allocation3 + $0x30] sm:$0xff]
      %v929 = vld [vmem:[#allocation3 + $0x38] sm:$0xff]
      %v930 = vld [vmem:[#allocation3 + $0x40] sm:$0xff]
      %v931 = vld [vmem:[#allocation3 + $0x48] sm:$0xff]
      %v932 = vld [vmem:[#allocation3 + $0x50] sm:$0xff]
      %v933 = vld [vmem:[#allocation3 + $0x58] sm:$0xff]
      %v934 = vld [vmem:[#allocation3 + $0x60] sm:$0xff]
      %v935 = vld [vmem:[#allocation3 + $0x68] sm:$0xff]
      %v936 = vld [vmem:[#allocation3 + $0x70] sm:$0xff]
      %v937 = vld [vmem:[#allocation3 + $0x78] sm:$0xff]
      %v938 = vmul.f32 %v763, %v922
      %v939 = vmul.f32 %v765, %v923
      %v940 = vmul.f32 %v767, %v924
      %v941 = vmul.f32 %v769, %v925
      %v942 = vmul.f32 %v771, %v926
      %v943 = vmul.f32 %v773, %v927
      %v944 = vmul.f32 %v775, %v928
      %v945 = vmul.f32 %v777, %v929
      %v946 = vmul.f32 %v779, %v930
      %v947 = vmul.f32 %v781, %v931
      %v948 = vmul.f32 %v783, %v932
      %v949 = vmul.f32 %v785, %v933
      %v950 = vmul.f32 %v787, %v934
      %v951 = vmul.f32 %v789, %v935
      %v952 = vmul.f32 %v791, %v936
      %v953 = vmul.f32 %v793, %v937
      %954 = vadd.xlane.f32.xlu0 %v891
      %v955 = vpop.xlane.xlu0 %954
      %956 = vadd.xlane.f32.xlu0 %v893
      %v957 = vpop.xlane.xlu0 %956
      %958 = vadd.xlane.f32.xlu0 %v895
      %v959 = vpop.xlane.xlu0 %958
      %960 = vadd.xlane.f32.xlu0 %v897
      %v961 = vpop.xlane.xlu0 %960
      %962 = vadd.xlane.f32.xlu0 %v899
      %v963 = vpop.xlane.xlu0 %962
      %964 = vadd.xlane.f32.xlu0 %v901
      %v965 = vpop.xlane.xlu0 %964
      %966 = vadd.xlane.f32.xlu0 %v903
      %v967 = vpop.xlane.xlu0 %966
      %968 = vadd.xlane.f32.xlu0 %v905
      %v969 = vpop.xlane.xlu0 %968
      %970 = vadd.xlane.f32.xlu0 %v907
      %v971 = vpop.xlane.xlu0 %970
      %972 = vadd.xlane.f32.xlu0 %v909
      %v973 = vpop.xlane.xlu0 %972
      %974 = vadd.xlane.f32.xlu0 %v911
      %v975 = vpop.xlane.xlu0 %974
      %976 = vadd.xlane.f32.xlu0 %v913
      %v977 = vpop.xlane.xlu0 %976
      %978 = vadd.xlane.f32.xlu0 %v915
      %v979 = vpop.xlane.xlu0 %978
      %980 = vadd.xlane.f32.xlu0 %v917
      %v981 = vpop.xlane.xlu0 %980
      %982 = vadd.xlane.f32.xlu0 %v919
      %v983 = vpop.xlane.xlu0 %982
      %984 = vadd.xlane.f32.xlu0 %v921
      %v985 = vpop.xlane.xlu0 %984
      %v986 = vadd.f32 %v938, %v955
      %v987 = vadd.f32 %v939, %v957
      %v988 = vadd.f32 %v940, %v959
      %v989 = vadd.f32 %v941, %v961
      %v990 = vadd.f32 %v942, %v963
      %v991 = vadd.f32 %v943, %v965
      %v992 = vadd.f32 %v944, %v967
      %v993 = vadd.f32 %v945, %v969
      %v994 = vadd.f32 %v946, %v971
      %v995 = vadd.f32 %v947, %v973
      %v996 = vadd.f32 %v948, %v975
      %v997 = vadd.f32 %v949, %v977
      %v998 = vadd.f32 %v950, %v979
      %v999 = vadd.f32 %v951, %v981
      %v1000 = vadd.f32 %v952, %v983
      %v1001 = vadd.f32 %v953, %v985
      %vm1002 = vcmask 7168
      %1003 = vst.msk [vmem:[#allocation3] sm:$0xff] %vm1002, %v986
      %1004 = vst.msk [vmem:[#allocation3 + $0x8] sm:$0xff] %vm1002, %v987
      %1005 = vst.msk [vmem:[#allocation3 + $0x10] sm:$0xff] %vm1002, %v988
      %1006 = vst.msk [vmem:[#allocation3 + $0x18] sm:$0xff] %vm1002, %v989
      %1007 = vst.msk [vmem:[#allocation3 + $0x20] sm:$0xff] %vm1002, %v990
      %1008 = vst.msk [vmem:[#allocation3 + $0x28] sm:$0xff] %vm1002, %v991
      %1009 = vst.msk [vmem:[#allocation3 + $0x30] sm:$0xff] %vm1002, %v992
      %1010 = vst.msk [vmem:[#allocation3 + $0x38] sm:$0xff] %vm1002, %v993
      %1011 = vst.msk [vmem:[#allocation3 + $0x40] sm:$0xff] %vm1002, %v994
      %1012 = vst.msk [vmem:[#allocation3 + $0x48] sm:$0xff] %vm1002, %v995
      %1013 = vst.msk [vmem:[#allocation3 + $0x50] sm:$0xff] %vm1002, %v996
      %1014 = vst.msk [vmem:[#allocation3 + $0x58] sm:$0xff] %vm1002, %v997
      %1015 = vst.msk [vmem:[#allocation3 + $0x60] sm:$0xff] %vm1002, %v998
      %1016 = vst.msk [vmem:[#allocation3 + $0x68] sm:$0xff] %vm1002, %v999
      %1017 = vst.msk [vmem:[#allocation3 + $0x70] sm:$0xff] %vm1002, %v1000
      %1018 = vst.msk [vmem:[#allocation3 + $0x78] sm:$0xff] %vm1002, %v1001
      %v1019 = vld [vmem:[#allocation4] sm:$0xff]
      %v1020 = vld [vmem:[#allocation4 + $0x8] sm:$0xff]
      %v1021 = vld [vmem:[#allocation4 + $0x10] sm:$0xff]
      %v1022 = vld [vmem:[#allocation4 + $0x18] sm:$0xff]
      %v1023 = vld [vmem:[#allocation4 + $0x20] sm:$0xff]
      %v1024 = vld [vmem:[#allocation4 + $0x28] sm:$0xff]
      %v1025 = vld [vmem:[#allocation4 + $0x30] sm:$0xff]
      %v1026 = vld [vmem:[#allocation4 + $0x38] sm:$0xff]
      %v1027 = vld [vmem:[#allocation4 + $0x40] sm:$0xff]
      %v1028 = vld [vmem:[#allocation4 + $0x48] sm:$0xff]
      %v1029 = vld [vmem:[#allocation4 + $0x50] sm:$0xff]
      %v1030 = vld [vmem:[#allocation4 + $0x58] sm:$0xff]
      %v1031 = vld [vmem:[#allocation4 + $0x60] sm:$0xff]
      %v1032 = vld [vmem:[#allocation4 + $0x68] sm:$0xff]
      %v1033 = vld [vmem:[#allocation4 + $0x70] sm:$0xff]
      %v1034 = vld [vmem:[#allocation4 + $0x78] sm:$0xff]
      %1036 = vset.pattern.permute.xlu0 0
      %1037 = vperm.xlu0 %1036, %v763
      %v1038 = vpop.permute.xlu0 %1037
      %1041 = vset.pattern.permute.xlu0 0
      %1042 = vperm.xlu0 %1041, %v765
      %v1043 = vpop.permute.xlu0 %1042
      %1046 = vset.pattern.permute.xlu0 0
      %1047 = vperm.xlu0 %1046, %v767
      %v1048 = vpop.permute.xlu0 %1047
      %1051 = vset.pattern.permute.xlu0 0
      %1052 = vperm.xlu0 %1051, %v769
      %v1053 = vpop.permute.xlu0 %1052
      %1056 = vset.pattern.permute.xlu0 0
      %1057 = vperm.xlu0 %1056, %v771
      %v1058 = vpop.permute.xlu0 %1057
      %1061 = vset.pattern.permute.xlu0 0
      %1062 = vperm.xlu0 %1061, %v773
      %v1063 = vpop.permute.xlu0 %1062
      %1066 = vset.pattern.permute.xlu0 0
      %1067 = vperm.xlu0 %1066, %v775
      %v1068 = vpop.permute.xlu0 %1067
      %1071 = vset.pattern.permute.xlu0 0
      %1072 = vperm.xlu0 %1071, %v777
      %v1073 = vpop.permute.xlu0 %1072
      %1076 = vset.pattern.permute.xlu0 0
      %1077 = vperm.xlu0 %1076, %v779
      %v1078 = vpop.permute.xlu0 %1077
      %1081 = vset.pattern.permute.xlu0 0
      %1082 = vperm.xlu0 %1081, %v781
      %v1083 = vpop.permute.xlu0 %1082
      %1086 = vset.pattern.permute.xlu0 0
      %1087 = vperm.xlu0 %1086, %v783
      %v1088 = vpop.permute.xlu0 %1087
      %1091 = vset.pattern.permute.xlu0 0
      %1092 = vperm.xlu0 %1091, %v785
      %v1093 = vpop.permute.xlu0 %1092
      %1096 = vset.pattern.permute.xlu0 0
      %1097 = vperm.xlu0 %1096, %v787
      %v1098 = vpop.permute.xlu0 %1097
      %1101 = vset.pattern.permute.xlu0 0
      %1102 = vperm.xlu0 %1101, %v789
      %v1103 = vpop.permute.xlu0 %1102
      %1106 = vset.pattern.permute.xlu0 0
      %1107 = vperm.xlu0 %1106, %v791
      %v1108 = vpop.permute.xlu0 %1107
      %1111 = vset.pattern.permute.xlu0 0
      %1112 = vperm.xlu0 %1111, %v793
      %v1113 = vpop.permute.xlu0 %1112
      %v1115 = vmul.f32 %v1038, %v1019
      %v1116 = vmul.f32 %v1043, %v1020
      %v1117 = vmul.f32 %v1048, %v1021
      %v1118 = vmul.f32 %v1053, %v1022
      %v1119 = vmul.f32 %v1058, %v1023
      %v1120 = vmul.f32 %v1063, %v1024
      %v1121 = vmul.f32 %v1068, %v1025
      %v1122 = vmul.f32 %v1073, %v1026
      %v1123 = vmul.f32 %v1078, %v1027
      %v1124 = vmul.f32 %v1083, %v1028
      %v1125 = vmul.f32 %v1088, %v1029
      %v1126 = vmul.f32 %v1093, %v1030
      %v1127 = vmul.f32 %v1098, %v1031
      %v1128 = vmul.f32 %v1103, %v1032
      %v1129 = vmul.f32 %v1108, %v1033
      %v1130 = vmul.f32 %v1113, %v1034
      %v1131 = vpack.c.bf16 %v893, %v891
      %v1132 = vpack.c.bf16 %v897, %v895
      %v1133 = vpack.c.bf16 %v901, %v899
      %v1134 = vpack.c.bf16 %v905, %v903
      %v1135 = vpack.c.bf16 %v909, %v907
      %v1136 = vpack.c.bf16 %v913, %v911
      %v1137 = vpack.c.bf16 %v917, %v915
      %v1138 = vpack.c.bf16 %v921, %v919
      %v1155 = vunpack.c.l.b16 %v424
      %v1156 = vunpack.c.l.b16 %v425
      %v1157 = vunpack.c.l.b16 %v426
      %v1158 = vunpack.c.l.b16 %v427
      %v1159 = vunpack.c.l.b16 %v428
      %v1160 = vunpack.c.l.b16 %v429
      %v1161 = vunpack.c.l.b16 %v430
      %v1162 = vunpack.c.l.b16 %v431
      %v1163 = vunpack.c.l.b16 %v432
      %v1164 = vunpack.c.l.b16 %v433
      %v1165 = vunpack.c.l.b16 %v434
      %v1166 = vunpack.c.l.b16 %v435
      %v1167 = vunpack.c.l.b16 %v436
      %v1168 = vunpack.c.l.b16 %v437
      %v1169 = vunpack.c.l.b16 %v438
      %v1170 = vunpack.c.l.b16 %v439
      %v1171 = vpack.c.b16 %v1156, %v1155
      %v1172 = vpack.c.b16 %v1158, %v1157
      %v1173 = vpack.c.b16 %v1160, %v1159
      %v1174 = vpack.c.b16 %v1162, %v1161
      %v1175 = vpack.c.b16 %v1164, %v1163
      %v1176 = vpack.c.b16 %v1166, %v1165
      %v1177 = vpack.c.b16 %v1168, %v1167
      %v1178 = vpack.c.b16 %v1170, %v1169
      %1187 = vmatprep.subr.bf16.mxu0 0
      %1188 = vmatpush1.bf16.msra.mxu0 %v1171
      %1189 = vmatprep.subr.bf16.mxu0 0
      %1190 = vmatpush1.bf16.msra.mxu0 %v1172
      %1191 = vmatprep.subr.bf16.mxu0 0
      %1192 = vmatpush1.bf16.msra.mxu0 %v1173
      %1193 = vmatprep.subr.bf16.mxu0 0
      %1194 = vmatpush1.bf16.msra.mxu0 %v1174
      %1195 = vmatprep.subr.bf16.mxu0 0
      %1196 = vmatpush1.bf16.msra.mxu0 %v1175
      %1197 = vmatprep.subr.bf16.mxu0 0
      %1198 = vmatpush1.bf16.msra.mxu0 %v1176
      %1199 = vmatprep.subr.bf16.mxu0 0
      %1200 = vmatpush1.bf16.msra.mxu0 %v1177
      %1201 = vmatprep.subr.bf16.mxu0 0
      %1202 = vmatpush1.bf16.msra.mxu0 %v1178
      %1203 = vmatprep.subr.bf16.mxu0 0
      %1204 = vmatpush1.bf16.msra.mxu0 0
      %1205 = vmatprep.subr.bf16.mxu0 0
      %1206 = vmatpush1.bf16.msra.mxu0 0
      %1207 = vmatprep.subr.bf16.mxu0 0
      %1208 = vmatpush1.bf16.msra.mxu0 0
      %1209 = vmatprep.subr.bf16.mxu0 0
      %1210 = vmatpush1.bf16.msra.mxu0 0
      %1211 = vmatprep.subr.bf16.mxu0 0
      %1212 = vmatpush1.bf16.msra.mxu0 0
      %1213 = vmatprep.subr.bf16.mxu0 0
      %1214 = vmatpush1.bf16.msra.mxu0 0
      %1215 = vmatprep.subr.bf16.mxu0 0
      %1216 = vmatpush1.bf16.msra.mxu0 0
      %1217 = vmatprep.subr.bf16.mxu0 0
      %1218 = vmatpush1.bf16.msra.mxu0 0
      %1219 = vmatprep.mubr.bf16.mxu0 0
      %1220 = vmatmul.mubr.bf16.gmra.mrb[0].mxu0 %v1131
      %v1221 = vpop.f32.mrb[0].mxu0
      %v1222 = vadd.f32 0.0, %v1221
      %v1223 = vpop.f32.mrb[0].mxu0
      %v1224 = vpop.f32.mrb[0].mxu0
      %v1225 = vadd.f32 0.0, %v1224
      %v1226 = vpop.f32.mrb[0].mxu0
      %1227 = vmatprep.mubr.bf16.mxu0 0
      %1228 = vmatmul.mubr.bf16.gmra.mrb[0].mxu0 %v1132
      %v1229 = vpop.f32.mrb[0].mxu0
      %v1230 = vadd.f32 0.0, %v1229
      %v1231 = vpop.f32.mrb[0].mxu0
      %v1232 = vpop.f32.mrb[0].mxu0
      %v1233 = vadd.f32 0.0, %v1232
      %v1234 = vpop.f32.mrb[0].mxu0
      %1235 = vmatprep.mubr.bf16.mxu0 0
      %1236 = vmatmul.mubr.bf16.gmra.mrb[0].mxu0 %v1133
      %v1237 = vpop.f32.mrb[0].mxu0
      %v1238 = vadd.f32 0.0, %v1237
      %v1239 = vpop.f32.mrb[0].mxu0
      %v1240 = vpop.f32.mrb[0].mxu0
      %v1241 = vadd.f32 0.0, %v1240
      %v1242 = vpop.f32.mrb[0].mxu0
      %1243 = vmatprep.mubr.bf16.mxu0 0
      %1244 = vmatmul.mubr.bf16.gmra.mrb[0].mxu0 %v1134
      %v1245 = vpop.f32.mrb[0].mxu0
      %v1246 = vadd.f32 0.0, %v1245
      %v1247 = vpop.f32.mrb[0].mxu0
      %v1248 = vpop.f32.mrb[0].mxu0
      %v1249 = vadd.f32 0.0, %v1248
      %v1250 = vpop.f32.mrb[0].mxu0
      %1251 = vmatprep.mubr.bf16.mxu0 0
      %1252 = vmatmul.mubr.bf16.gmra.mrb[0].mxu0 %v1135
      %v1253 = vpop.f32.mrb[0].mxu0
      %v1254 = vadd.f32 0.0, %v1253
      %v1255 = vpop.f32.mrb[0].mxu0
      %v1256 = vpop.f32.mrb[0].mxu0
      %v1257 = vadd.f32 0.0, %v1256
      %v1258 = vpop.f32.mrb[0].mxu0
      %1259 = vmatprep.mubr.bf16.mxu0 0
      %1260 = vmatmul.mubr.bf16.gmra.mrb[0].mxu0 %v1136
      %v1261 = vpop.f32.mrb[0].mxu0
      %v1262 = vadd.f32 0.0, %v1261
      %v1263 = vpop.f32.mrb[0].mxu0
      %v1264 = vpop.f32.mrb[0].mxu0
      %v1265 = vadd.f32 0.0, %v1264
      %v1266 = vpop.f32.mrb[0].mxu0
      %1267 = vmatprep.mubr.bf16.mxu0 0
      %1268 = vmatmul.mubr.bf16.gmra.mrb[0].mxu0 %v1137
      %v1269 = vpop.f32.mrb[0].mxu0
      %v1270 = vadd.f32 0.0, %v1269
      %v1271 = vpop.f32.mrb[0].mxu0
      %v1272 = vpop.f32.mrb[0].mxu0
      %v1273 = vadd.f32 0.0, %v1272
      %v1274 = vpop.f32.mrb[0].mxu0
      %1275 = vmatprep.mubr.bf16.mxu0 0
      %1276 = vmatmul.mubr.bf16.gmra.mrb[0].mxu0 %v1138
      %v1277 = vpop.f32.mrb[0].mxu0
      %v1278 = vadd.f32 0.0, %v1277
      %v1279 = vpop.f32.mrb[0].mxu0
      %v1280 = vpop.f32.mrb[0].mxu0
      %v1281 = vadd.f32 0.0, %v1280
      %v1282 = vpop.f32.mrb[0].mxu0
      %1283 = vdwg.mxu0
      %v1284 = vadd.f32 %v1115, %v1222
      %v1285 = vadd.f32 %v1116, %v1225
      %v1286 = vadd.f32 %v1117, %v1230
      %v1287 = vadd.f32 %v1118, %v1233
      %v1288 = vadd.f32 %v1119, %v1238
      %v1289 = vadd.f32 %v1120, %v1241
      %v1290 = vadd.f32 %v1121, %v1246
      %v1291 = vadd.f32 %v1122, %v1249
      %v1292 = vadd.f32 %v1123, %v1254
      %v1293 = vadd.f32 %v1124, %v1257
      %v1294 = vadd.f32 %v1125, %v1262
      %v1295 = vadd.f32 %v1126, %v1265
      %v1296 = vadd.f32 %v1127, %v1270
      %v1297 = vadd.f32 %v1128, %v1273
      %v1298 = vadd.f32 %v1129, %v1278
      %v1299 = vadd.f32 %v1130, %v1281
      %1300 = vst.msk [vmem:[#allocation4] sm:$0xff] %vm520, %v1284
      %1301 = vst.msk [vmem:[#allocation4 + $0x8] sm:$0xff] %vm520, %v1285
      %1302 = vst.msk [vmem:[#allocation4 + $0x10] sm:$0xff] %vm520, %v1286
      %1303 = vst.msk [vmem:[#allocation4 + $0x18] sm:$0xff] %vm520, %v1287
      %1304 = vst.msk [vmem:[#allocation4 + $0x20] sm:$0xff] %vm520, %v1288
      %1305 = vst.msk [vmem:[#allocation4 + $0x28] sm:$0xff] %vm520, %v1289
      %1306 = vst.msk [vmem:[#allocation4 + $0x30] sm:$0xff] %vm520, %v1290
      %1307 = vst.msk [vmem:[#allocation4 + $0x38] sm:$0xff] %vm520, %v1291
      %1308 = vst.msk [vmem:[#allocation4 + $0x40] sm:$0xff] %vm520, %v1292
      %1309 = vst.msk [vmem:[#allocation4 + $0x48] sm:$0xff] %vm520, %v1293
      %1310 = vst.msk [vmem:[#allocation4 + $0x50] sm:$0xff] %vm520, %v1294
      %1311 = vst.msk [vmem:[#allocation4 + $0x58] sm:$0xff] %vm520, %v1295
      %1312 = vst.msk [vmem:[#allocation4 + $0x60] sm:$0xff] %vm520, %v1296
      %1313 = vst.msk [vmem:[#allocation4 + $0x68] sm:$0xff] %vm520, %v1297
      %1314 = vst.msk [vmem:[#allocation4 + $0x70] sm:$0xff] %vm520, %v1298
      %1315 = vst.msk [vmem:[#allocation4 + $0x78] sm:$0xff] %vm520, %v1299
      %1316 = vst.msk [vmem:[#allocation2] sm:$0xff] %vm1002, %v730
      %1317 = vst.msk [vmem:[#allocation2 + $0x8] sm:$0xff] %vm1002, %v731
      %1318 = vst.msk [vmem:[#allocation2 + $0x10] sm:$0xff] %vm1002, %v732
      %1319 = vst.msk [vmem:[#allocation2 + $0x18] sm:$0xff] %vm1002, %v733
      %1320 = vst.msk [vmem:[#allocation2 + $0x20] sm:$0xff] %vm1002, %v734
      %1321 = vst.msk [vmem:[#allocation2 + $0x28] sm:$0xff] %vm1002, %v735
      %1322 = vst.msk [vmem:[#allocation2 + $0x30] sm:$0xff] %vm1002, %v736
      %1323 = vst.msk [vmem:[#allocation2 + $0x38] sm:$0xff] %vm1002, %v737
      %1324 = vst.msk [vmem:[#allocation2 + $0x40] sm:$0xff] %vm1002, %v738
      %1325 = vst.msk [vmem:[#allocation2 + $0x48] sm:$0xff] %vm1002, %v739
      %1326 = vst.msk [vmem:[#allocation2 + $0x50] sm:$0xff] %vm1002, %v740
      %1327 = vst.msk [vmem:[#allocation2 + $0x58] sm:$0xff] %vm1002, %v741
      %1328 = vst.msk [vmem:[#allocation2 + $0x60] sm:$0xff] %vm1002, %v742
      %1329 = vst.msk [vmem:[#allocation2 + $0x68] sm:$0xff] %vm1002, %v743
      %1330 = vst.msk [vmem:[#allocation2 + $0x70] sm:$0xff] %vm1002, %v744
      %1331 = vst.msk [vmem:[#allocation2 + $0x78] sm:$0xff] %vm1002, %v745
      %1332 = vrot.lane.b32.xlu0 %v472, 96
      %v1333 = vpop.permute.xlu0 %1332
      %1334 = vrot.lane.b32.xlu0 %v473, 96
      %v1335 = vpop.permute.xlu0 %1334
      %1336 = vrot.lane.b32.xlu0 %v474, 96
      %v1337 = vpop.permute.xlu0 %1336
      %1338 = vrot.lane.b32.xlu0 %v475, 96
      %v1339 = vpop.permute.xlu0 %1338
      %1340 = vrot.lane.b32.xlu0 %v476, 96
      %v1341 = vpop.permute.xlu0 %1340
      %1342 = vrot.lane.b32.xlu0 %v477, 96
      %v1343 = vpop.permute.xlu0 %1342
      %1344 = vrot.lane.b32.xlu0 %v478, 96
      %v1345 = vpop.permute.xlu0 %1344
      %1346 = vrot.lane.b32.xlu0 %v479, 96
      %v1347 = vpop.permute.xlu0 %1346
      %1348 = vrot.lane.b32.xlu0 %v512, 96
      %v1349 = vpop.permute.xlu0 %1348
      %1350 = vrot.lane.b32.xlu0 %v513, 96
      %v1351 = vpop.permute.xlu0 %1350
      %1352 = vrot.lane.b32.xlu0 %v514, 96
      %v1353 = vpop.permute.xlu0 %1352
      %1354 = vrot.lane.b32.xlu0 %v515, 96
      %v1355 = vpop.permute.xlu0 %1354
      %1356 = vrot.lane.b32.xlu0 %v516, 96
      %v1357 = vpop.permute.xlu0 %1356
      %1358 = vrot.lane.b32.xlu0 %v517, 96
      %v1359 = vpop.permute.xlu0 %1358
      %1360 = vrot.lane.b32.xlu0 %v518, 96
      %v1361 = vpop.permute.xlu0 %1360
      %1362 = vrot.lane.b32.xlu0 %v519, 96
      %v1363 = vpop.permute.xlu0 %1362
      %v1365 = vsel %vm520, %v1333, 0
      %v1368 = vsel %vm520, %v1335, 0
      %v1371 = vsel %vm520, %v1337, 0
      %v1374 = vsel %vm520, %v1339, 0
      %v1377 = vsel %vm520, %v1341, 0
      %v1380 = vsel %vm520, %v1343, 0
      %v1383 = vsel %vm520, %v1345, 0
      %v1386 = vsel %vm520, %v1347, 0
      %v1389 = vsel %vm520, %v1349, 0
      %v1392 = vsel %vm520, %v1351, 0
      %v1395 = vsel %vm520, %v1353, 0
      %v1398 = vsel %vm520, %v1355, 0
      %v1401 = vsel %vm520, %v1357, 0
      %v1404 = vsel %vm520, %v1359, 0
      %v1407 = vsel %vm520, %v1361, 0
      %v1410 = vsel %vm520, %v1363, 0
      %1412 = vmatprep.subr.bf16.mxu0 0
      %1413 = vmatpush1.bf16.xpose.msra.mxu0 %v1389
      %1414 = vmatprep.subr.bf16.mxu0 0
      %1415 = vmatpush1.bf16.xpose.msra.mxu0 %v1392
      %1416 = vmatprep.subr.bf16.mxu0 0
      %1417 = vmatpush1.bf16.xpose.msra.mxu0 %v1395
      %1418 = vmatprep.subr.bf16.mxu0 0
      %1419 = vmatpush1.bf16.xpose.msra.mxu0 %v1398
      %1420 = vmatprep.subr.bf16.mxu0 0
      %1421 = vmatpush1.bf16.xpose.msra.mxu0 %v1401
      %1422 = vmatprep.subr.bf16.mxu0 0
      %1423 = vmatpush1.bf16.xpose.msra.mxu0 %v1404
      %1424 = vmatprep.subr.bf16.mxu0 0
      %1425 = vmatpush1.bf16.xpose.msra.mxu0 %v1407
      %1426 = vmatprep.subr.bf16.mxu0 0
      %1427 = vmatpush1.bf16.xpose.msra.mxu0 %v1410
      %1428 = vmatprep.subr.bf16.mxu0 0
      %1429 = vmatpush1.bf16.xpose.msra.mxu0 0
      %1430 = vmatprep.subr.bf16.mxu0 0
      %1431 = vmatpush1.bf16.xpose.msra.mxu0 0
      %1432 = vmatprep.subr.bf16.mxu0 0
      %1433 = vmatpush1.bf16.xpose.msra.mxu0 0
      %1434 = vmatprep.subr.bf16.mxu0 0
      %1435 = vmatpush1.bf16.xpose.msra.mxu0 0
      %1436 = vmatprep.subr.bf16.mxu0 0
      %1437 = vmatpush1.bf16.xpose.msra.mxu0 0
      %1438 = vmatprep.subr.bf16.mxu0 0
      %1439 = vmatpush1.bf16.xpose.msra.mxu0 0
      %1440 = vmatprep.subr.bf16.mxu0 0
      %1441 = vmatpush1.bf16.xpose.msra.mxu0 0
      %1442 = vmatprep.subr.bf16.mxu0 0
      %1443 = vmatpush1.bf16.xpose.msra.mxu0 0
      %1444 = vmatprep.mubr.bf16.mxu0 0
      %1445 = vmatmul.mubr.bf16.gmra.mrb[0].mxu0 %v1365
      %v1446 = vpop.f32.mrb[0].mxu0
      %v1447 = vadd.f32 0.0, %v1446
      %v1448 = vpop.f32.mrb[0].mxu0
      %v1449 = vpop.f32.mrb[0].mxu0
      %v1450 = vadd.f32 0.0, %v1449
      %v1451 = vpop.f32.mrb[0].mxu0
      %1452 = vmatprep.mubr.bf16.mxu0 0
      %1453 = vmatmul.mubr.bf16.gmra.mrb[0].mxu0 %v1368
      %v1454 = vpop.f32.mrb[0].mxu0
      %v1455 = vadd.f32 0.0, %v1454
      %v1456 = vpop.f32.mrb[0].mxu0
      %v1457 = vpop.f32.mrb[0].mxu0
      %v1458 = vadd.f32 0.0, %v1457
      %v1459 = vpop.f32.mrb[0].mxu0
      %1460 = vmatprep.mubr.bf16.mxu0 0
      %1461 = vmatmul.mubr.bf16.gmra.mrb[0].mxu0 %v1371
      %v1462 = vpop.f32.mrb[0].mxu0
      %v1463 = vadd.f32 0.0, %v1462
      %v1464 = vpop.f32.mrb[0].mxu0
      %v1465 = vpop.f32.mrb[0].mxu0
      %v1466 = vadd.f32 0.0, %v1465
      %v1467 = vpop.f32.mrb[0].mxu0
      %1468 = vmatprep.mubr.bf16.mxu0 0
      %1469 = vmatmul.mubr.bf16.gmra.mrb[0].mxu0 %v1374
      %v1470 = vpop.f32.mrb[0].mxu0
      %v1471 = vadd.f32 0.0, %v1470
      %v1472 = vpop.f32.mrb[0].mxu0
      %v1473 = vpop.f32.mrb[0].mxu0
      %v1474 = vadd.f32 0.0, %v1473
      %v1475 = vpop.f32.mrb[0].mxu0
      %1476 = vmatprep.mubr.bf16.mxu0 0
      %1477 = vmatmul.mubr.bf16.gmra.mrb[0].mxu0 %v1377
      %v1478 = vpop.f32.mrb[0].mxu0
      %v1479 = vadd.f32 0.0, %v1478
      %v1480 = vpop.f32.mrb[0].mxu0
      %v1481 = vpop.f32.mrb[0].mxu0
      %v1482 = vadd.f32 0.0, %v1481
      %v1483 = vpop.f32.mrb[0].mxu0
      %1484 = vmatprep.mubr.bf16.mxu0 0
      %1485 = vmatmul.mubr.bf16.gmra.mrb[0].mxu0 %v1380
      %v1486 = vpop.f32.mrb[0].mxu0
      %v1487 = vadd.f32 0.0, %v1486
      %v1488 = vpop.f32.mrb[0].mxu0
      %v1489 = vpop.f32.mrb[0].mxu0
      %v1490 = vadd.f32 0.0, %v1489
      %v1491 = vpop.f32.mrb[0].mxu0
      %1492 = vmatprep.mubr.bf16.mxu0 0
      %1493 = vmatmul.mubr.bf16.gmra.mrb[0].mxu0 %v1383
      %v1494 = vpop.f32.mrb[0].mxu0
      %v1495 = vadd.f32 0.0, %v1494
      %v1496 = vpop.f32.mrb[0].mxu0
      %v1497 = vpop.f32.mrb[0].mxu0
      %v1498 = vadd.f32 0.0, %v1497
      %v1499 = vpop.f32.mrb[0].mxu0
      %1500 = vmatprep.mubr.bf16.mxu0 0
      %1501 = vmatmul.mubr.bf16.gmra.mrb[0].mxu0 %v1386
      %v1502 = vpop.f32.mrb[0].mxu0
      %v1503 = vadd.f32 0.0, %v1502
      %v1504 = vpop.f32.mrb[0].mxu0
      %v1505 = vpop.f32.mrb[0].mxu0
      %v1506 = vadd.f32 0.0, %v1505
      %v1507 = vpop.f32.mrb[0].mxu0
      %1508 = vdwg.mxu0
      %v1509 = vmul.f32 %v1447, 0.17677669
      %v1510 = vmul.f32 %v1450, 0.17677669
      %v1511 = vmul.f32 %v1455, 0.17677669
      %v1512 = vmul.f32 %v1458, 0.17677669
      %v1513 = vmul.f32 %v1463, 0.17677669
      %v1514 = vmul.f32 %v1466, 0.17677669
      %v1515 = vmul.f32 %v1471, 0.17677669
      %v1516 = vmul.f32 %v1474, 0.17677669
      %v1517 = vmul.f32 %v1479, 0.17677669
      %v1518 = vmul.f32 %v1482, 0.17677669
      %v1519 = vmul.f32 %v1487, 0.17677669
      %v1520 = vmul.f32 %v1490, 0.17677669
      %v1521 = vmul.f32 %v1495, 0.17677669
      %v1522 = vmul.f32 %v1498, 0.17677669
      %v1523 = vmul.f32 %v1503, 0.17677669
      %v1524 = vmul.f32 %v1506, 0.17677669
      %s1525 = scalar_lea.vmem [#allocation2], 128
      %v1526 = vld [vmem:[%s1525] sm:$0xff]
      %v1527 = vld [vmem:[%s1525 + $0x8] sm:$0xff]
      %v1528 = vld [vmem:[%s1525 + $0x10] sm:$0xff]
      %v1529 = vld [vmem:[%s1525 + $0x18] sm:$0xff]
      %v1530 = vld [vmem:[%s1525 + $0x20] sm:$0xff]
      %v1531 = vld [vmem:[%s1525 + $0x28] sm:$0xff]
      %v1532 = vld [vmem:[%s1525 + $0x30] sm:$0xff]
      %v1533 = vld [vmem:[%s1525 + $0x38] sm:$0xff]
      %v1534 = vld [vmem:[%s1525 + $0x40] sm:$0xff]
      %v1535 = vld [vmem:[%s1525 + $0x48] sm:$0xff]
      %v1536 = vld [vmem:[%s1525 + $0x50] sm:$0xff]
      %v1537 = vld [vmem:[%s1525 + $0x58] sm:$0xff]
      %v1538 = vld [vmem:[%s1525 + $0x60] sm:$0xff]
      %v1539 = vld [vmem:[%s1525 + $0x68] sm:$0xff]
      %v1540 = vld [vmem:[%s1525 + $0x70] sm:$0xff]
      %v1541 = vld [vmem:[%s1525 + $0x78] sm:$0xff]
      %1542 = vmax.xlane.f32.xlu0 %v1509
      %v1543 = vpop.xlane.xlu0 %1542
      %1544 = vmax.xlane.f32.xlu0 %v1510
      %v1545 = vpop.xlane.xlu0 %1544
      %1546 = vmax.xlane.f32.xlu0 %v1511
      %v1547 = vpop.xlane.xlu0 %1546
      %1548 = vmax.xlane.f32.xlu0 %v1512
      %v1549 = vpop.xlane.xlu0 %1548
      %1550 = vmax.xlane.f32.xlu0 %v1513
      %v1551 = vpop.xlane.xlu0 %1550
      %1552 = vmax.xlane.f32.xlu0 %v1514
      %v1553 = vpop.xlane.xlu0 %1552
      %1554 = vmax.xlane.f32.xlu0 %v1515
      %v1555 = vpop.xlane.xlu0 %1554
      %1556 = vmax.xlane.f32.xlu0 %v1516
      %v1557 = vpop.xlane.xlu0 %1556
      %1558 = vmax.xlane.f32.xlu0 %v1517
      %v1559 = vpop.xlane.xlu0 %1558
      %1560 = vmax.xlane.f32.xlu0 %v1518
      %v1561 = vpop.xlane.xlu0 %1560
      %1562 = vmax.xlane.f32.xlu0 %v1519
      %v1563 = vpop.xlane.xlu0 %1562
      %1564 = vmax.xlane.f32.xlu0 %v1520
      %v1565 = vpop.xlane.xlu0 %1564
      %1566 = vmax.xlane.f32.xlu0 %v1521
      %v1567 = vpop.xlane.xlu0 %1566
      %1568 = vmax.xlane.f32.xlu0 %v1522
      %v1569 = vpop.xlane.xlu0 %1568
      %1570 = vmax.xlane.f32.xlu0 %v1523
      %v1571 = vpop.xlane.xlu0 %1570
      %1572 = vmax.xlane.f32.xlu0 %v1524
      %v1573 = vpop.xlane.xlu0 %1572
      %v1574 = vmax.f32 %v1526, %v1543
      %v1575 = vmax.f32 %v1527, %v1545
      %v1576 = vmax.f32 %v1528, %v1547
      %v1577 = vmax.f32 %v1529, %v1549
      %v1578 = vmax.f32 %v1530, %v1551
      %v1579 = vmax.f32 %v1531, %v1553
      %v1580 = vmax.f32 %v1532, %v1555
      %v1581 = vmax.f32 %v1533, %v1557
      %v1582 = vmax.f32 %v1534, %v1559
      %v1583 = vmax.f32 %v1535, %v1561
      %v1584 = vmax.f32 %v1536, %v1563
      %v1585 = vmax.f32 %v1537, %v1565
      %v1586 = vmax.f32 %v1538, %v1567
      %v1587 = vmax.f32 %v1539, %v1569
      %v1588 = vmax.f32 %v1540, %v1571
      %v1589 = vmax.f32 %v1541, %v1573
      %v1590 = vsub.f32 %v1526, %v1574
      %v1591 = vsub.f32 %v1527, %v1575
      %v1592 = vsub.f32 %v1528, %v1576
      %v1593 = vsub.f32 %v1529, %v1577
      %v1594 = vsub.f32 %v1530, %v1578
      %v1595 = vsub.f32 %v1531, %v1579
      %v1596 = vsub.f32 %v1532, %v1580
      %v1597 = vsub.f32 %v1533, %v1581
      %v1598 = vsub.f32 %v1534, %v1582
      %v1599 = vsub.f32 %v1535, %v1583
      %v1600 = vsub.f32 %v1536, %v1584
      %v1601 = vsub.f32 %v1537, %v1585
      %v1602 = vsub.f32 %v1538, %v1586
      %v1603 = vsub.f32 %v1539, %v1587
      %v1604 = vsub.f32 %v1540, %v1588
      %v1605 = vsub.f32 %v1541, %v1589
      %v1606 = vmul.f32 %v1590, 1.442695
      %v1607 = vpow.pop %v1606
      %v1608 = vmul.f32 %v1591, 1.442695
      %v1609 = vpow.pop %v1608
      %v1610 = vmul.f32 %v1592, 1.442695
      %v1611 = vpow.pop %v1610
      %v1612 = vmul.f32 %v1593, 1.442695
      %v1613 = vpow.pop %v1612
      %v1614 = vmul.f32 %v1594, 1.442695
      %v1615 = vpow.pop %v1614
      %v1616 = vmul.f32 %v1595, 1.442695
      %v1617 = vpow.pop %v1616
      %v1618 = vmul.f32 %v1596, 1.442695
      %v1619 = vpow.pop %v1618
      %v1620 = vmul.f32 %v1597, 1.442695
      %v1621 = vpow.pop %v1620
      %v1622 = vmul.f32 %v1598, 1.442695
      %v1623 = vpow.pop %v1622
      %v1624 = vmul.f32 %v1599, 1.442695
      %v1625 = vpow.pop %v1624
      %v1626 = vmul.f32 %v1600, 1.442695
      %v1627 = vpow.pop %v1626
      %v1628 = vmul.f32 %v1601, 1.442695
      %v1629 = vpow.pop %v1628
      %v1630 = vmul.f32 %v1602, 1.442695
      %v1631 = vpow.pop %v1630
      %v1632 = vmul.f32 %v1603, 1.442695
      %v1633 = vpow.pop %v1632
      %v1634 = vmul.f32 %v1604, 1.442695
      %v1635 = vpow.pop %v1634
      %v1636 = vmul.f32 %v1605, 1.442695
      %v1637 = vpow.pop %v1636
      %1639 = vset.pattern.permute.xlu0 0
      %1640 = vperm.xlu0 %1639, %v1574
      %v1641 = vpop.permute.xlu0 %1640
      %1644 = vset.pattern.permute.xlu0 0
      %1645 = vperm.xlu0 %1644, %v1575
      %v1646 = vpop.permute.xlu0 %1645
      %1649 = vset.pattern.permute.xlu0 0
      %1650 = vperm.xlu0 %1649, %v1576
      %v1651 = vpop.permute.xlu0 %1650
      %1654 = vset.pattern.permute.xlu0 0
      %1655 = vperm.xlu0 %1654, %v1577
      %v1656 = vpop.permute.xlu0 %1655
      %1659 = vset.pattern.permute.xlu0 0
      %1660 = vperm.xlu0 %1659, %v1578
      %v1661 = vpop.permute.xlu0 %1660
      %1664 = vset.pattern.permute.xlu0 0
      %1665 = vperm.xlu0 %1664, %v1579
      %v1666 = vpop.permute.xlu0 %1665
      %1669 = vset.pattern.permute.xlu0 0
      %1670 = vperm.xlu0 %1669, %v1580
      %v1671 = vpop.permute.xlu0 %1670
      %1674 = vset.pattern.permute.xlu0 0
      %1675 = vperm.xlu0 %1674, %v1581
      %v1676 = vpop.permute.xlu0 %1675
      %1679 = vset.pattern.permute.xlu0 0
      %1680 = vperm.xlu0 %1679, %v1582
      %v1681 = vpop.permute.xlu0 %1680
      %1684 = vset.pattern.permute.xlu0 0
      %1685 = vperm.xlu0 %1684, %v1583
      %v1686 = vpop.permute.xlu0 %1685
      %1689 = vset.pattern.permute.xlu0 0
      %1690 = vperm.xlu0 %1689, %v1584
      %v1691 = vpop.permute.xlu0 %1690
      %1694 = vset.pattern.permute.xlu0 0
      %1695 = vperm.xlu0 %1694, %v1585
      %v1696 = vpop.permute.xlu0 %1695
      %1699 = vset.pattern.permute.xlu0 0
      %1700 = vperm.xlu0 %1699, %v1586
      %v1701 = vpop.permute.xlu0 %1700
      %1704 = vset.pattern.permute.xlu0 0
      %1705 = vperm.xlu0 %1704, %v1587
      %v1706 = vpop.permute.xlu0 %1705
      %1709 = vset.pattern.permute.xlu0 0
      %1710 = vperm.xlu0 %1709, %v1588
      %v1711 = vpop.permute.xlu0 %1710
      %1714 = vset.pattern.permute.xlu0 0
      %1715 = vperm.xlu0 %1714, %v1589
      %v1716 = vpop.permute.xlu0 %1715
      %v1718 = vsub.f32 %v1509, %v1641
      %v1719 = vsub.f32 %v1510, %v1646
      %v1720 = vsub.f32 %v1511, %v1651
      %v1721 = vsub.f32 %v1512, %v1656
      %v1722 = vsub.f32 %v1513, %v1661
      %v1723 = vsub.f32 %v1514, %v1666
      %v1724 = vsub.f32 %v1515, %v1671
      %v1725 = vsub.f32 %v1516, %v1676
      %v1726 = vsub.f32 %v1517, %v1681
      %v1727 = vsub.f32 %v1518, %v1686
      %v1728 = vsub.f32 %v1519, %v1691
      %v1729 = vsub.f32 %v1520, %v1696
      %v1730 = vsub.f32 %v1521, %v1701
      %v1731 = vsub.f32 %v1522, %v1706
      %v1732 = vsub.f32 %v1523, %v1711
      %v1733 = vsub.f32 %v1524, %v1716
      %v1734 = vmul.f32 %v1718, 1.442695
      %v1735 = vpow.pop %v1734
      %v1736 = vmul.f32 %v1719, 1.442695
      %v1737 = vpow.pop %v1736
      %v1738 = vmul.f32 %v1720, 1.442695
      %v1739 = vpow.pop %v1738
      %v1740 = vmul.f32 %v1721, 1.442695
      %v1741 = vpow.pop %v1740
      %v1742 = vmul.f32 %v1722, 1.442695
      %v1743 = vpow.pop %v1742
      %v1744 = vmul.f32 %v1723, 1.442695
      %v1745 = vpow.pop %v1744
      %v1746 = vmul.f32 %v1724, 1.442695
      %v1747 = vpow.pop %v1746
      %v1748 = vmul.f32 %v1725, 1.442695
      %v1749 = vpow.pop %v1748
      %v1750 = vmul.f32 %v1726, 1.442695
      %v1751 = vpow.pop %v1750
      %v1752 = vmul.f32 %v1727, 1.442695
      %v1753 = vpow.pop %v1752
      %v1754 = vmul.f32 %v1728, 1.442695
      %v1755 = vpow.pop %v1754
      %v1756 = vmul.f32 %v1729, 1.442695
      %v1757 = vpow.pop %v1756
      %v1758 = vmul.f32 %v1730, 1.442695
      %v1759 = vpow.pop %v1758
      %v1760 = vmul.f32 %v1731, 1.442695
      %v1761 = vpow.pop %v1760
      %v1762 = vmul.f32 %v1732, 1.442695
      %v1763 = vpow.pop %v1762
      %v1764 = vmul.f32 %v1733, 1.442695
      %v1765 = vpow.pop %v1764
      %s1766 = scalar_lea.vmem [#allocation3], 128
      %v1767 = vld [vmem:[%s1766] sm:$0xff]
      %v1768 = vld [vmem:[%s1766 + $0x8] sm:$0xff]
      %v1769 = vld [vmem:[%s1766 + $0x10] sm:$0xff]
      %v1770 = vld [vmem:[%s1766 + $0x18] sm:$0xff]
      %v1771 = vld [vmem:[%s1766 + $0x20] sm:$0xff]
      %v1772 = vld [vmem:[%s1766 + $0x28] sm:$0xff]
      %v1773 = vld [vmem:[%s1766 + $0x30] sm:$0xff]
      %v1774 = vld [vmem:[%s1766 + $0x38] sm:$0xff]
      %v1775 = vld [vmem:[%s1766 + $0x40] sm:$0xff]
      %v1776 = vld [vmem:[%s1766 + $0x48] sm:$0xff]
      %v1777 = vld [vmem:[%s1766 + $0x50] sm:$0xff]
      %v1778 = vld [vmem:[%s1766 + $0x58] sm:$0xff]
      %v1779 = vld [vmem:[%s1766 + $0x60] sm:$0xff]
      %v1780 = vld [vmem:[%s1766 + $0x68] sm:$0xff]
      %v1781 = vld [vmem:[%s1766 + $0x70] sm:$0xff]
      %v1782 = vld [vmem:[%s1766 + $0x78] sm:$0xff]
      %v1783 = vmul.f32 %v1607, %v1767
      %v1784 = vmul.f32 %v1609, %v1768
      %v1785 = vmul.f32 %v1611, %v1769
      %v1786 = vmul.f32 %v1613, %v1770
      %v1787 = vmul.f32 %v1615, %v1771
      %v1788 = vmul.f32 %v1617, %v1772
      %v1789 = vmul.f32 %v1619, %v1773
      %v1790 = vmul.f32 %v1621, %v1774
      %v1791 = vmul.f32 %v1623, %v1775
      %v1792 = vmul.f32 %v1625, %v1776
      %v1793 = vmul.f32 %v1627, %v1777
      %v1794 = vmul.f32 %v1629, %v1778
      %v1795 = vmul.f32 %v1631, %v1779
      %v1796 = vmul.f32 %v1633, %v1780
      %v1797 = vmul.f32 %v1635, %v1781
      %v1798 = vmul.f32 %v1637, %v1782
      %1799 = vadd.xlane.f32.xlu0 %v1735
      %v1800 = vpop.xlane.xlu0 %1799
      %1801 = vadd.xlane.f32.xlu0 %v1737
      %v1802 = vpop.xlane.xlu0 %1801
      %1803 = vadd.xlane.f32.xlu0 %v1739
      %v1804 = vpop.xlane.xlu0 %1803
      %1805 = vadd.xlane.f32.xlu0 %v1741
      %v1806 = vpop.xlane.xlu0 %1805
      %1807 = vadd.xlane.f32.xlu0 %v1743
      %v1808 = vpop.xlane.xlu0 %1807
      %1809 = vadd.xlane.f32.xlu0 %v1745
      %v1810 = vpop.xlane.xlu0 %1809
      %1811 = vadd.xlane.f32.xlu0 %v1747
      %v1812 = vpop.xlane.xlu0 %1811
      %1813 = vadd.xlane.f32.xlu0 %v1749
      %v1814 = vpop.xlane.xlu0 %1813
      %1815 = vadd.xlane.f32.xlu0 %v1751
      %v1816 = vpop.xlane.xlu0 %1815
      %1817 = vadd.xlane.f32.xlu0 %v1753
      %v1818 = vpop.xlane.xlu0 %1817
      %1819 = vadd.xlane.f32.xlu0 %v1755
      %v1820 = vpop.xlane.xlu0 %1819
      %1821 = vadd.xlane.f32.xlu0 %v1757
      %v1822 = vpop.xlane.xlu0 %1821
      %1823 = vadd.xlane.f32.xlu0 %v1759
      %v1824 = vpop.xlane.xlu0 %1823
      %1825 = vadd.xlane.f32.xlu0 %v1761
      %v1826 = vpop.xlane.xlu0 %1825
      %1827 = vadd.xlane.f32.xlu0 %v1763
      %v1828 = vpop.xlane.xlu0 %1827
      %1829 = vadd.xlane.f32.xlu0 %v1765
      %v1830 = vpop.xlane.xlu0 %1829
      %v1831 = vadd.f32 %v1783, %v1800
      %v1832 = vadd.f32 %v1784, %v1802
      %v1833 = vadd.f32 %v1785, %v1804
      %v1834 = vadd.f32 %v1786, %v1806
      %v1835 = vadd.f32 %v1787, %v1808
      %v1836 = vadd.f32 %v1788, %v1810
      %v1837 = vadd.f32 %v1789, %v1812
      %v1838 = vadd.f32 %v1790, %v1814
      %v1839 = vadd.f32 %v1791, %v1816
      %v1840 = vadd.f32 %v1792, %v1818
      %v1841 = vadd.f32 %v1793, %v1820
      %v1842 = vadd.f32 %v1794, %v1822
      %v1843 = vadd.f32 %v1795, %v1824
      %v1844 = vadd.f32 %v1796, %v1826
      %v1845 = vadd.f32 %v1797, %v1828
      %v1846 = vadd.f32 %v1798, %v1830
      %1847 = vst.msk [vmem:[%s1766] sm:$0xff] %vm1002, %v1831
      %1848 = vst.msk [vmem:[%s1766 + $0x8] sm:$0xff] %vm1002, %v1832
      %1849 = vst.msk [vmem:[%s1766 + $0x10] sm:$0xff] %vm1002, %v1833
      %1850 = vst.msk [vmem:[%s1766 + $0x18] sm:$0xff] %vm1002, %v1834
      %1851 = vst.msk [vmem:[%s1766 + $0x20] sm:$0xff] %vm1002, %v1835
      %1852 = vst.msk [vmem:[%s1766 + $0x28] sm:$0xff] %vm1002, %v1836
      %1853 = vst.msk [vmem:[%s1766 + $0x30] sm:$0xff] %vm1002, %v1837
      %1854 = vst.msk [vmem:[%s1766 + $0x38] sm:$0xff] %vm1002, %v1838
      %1855 = vst.msk [vmem:[%s1766 + $0x40] sm:$0xff] %vm1002, %v1839
      %1856 = vst.msk [vmem:[%s1766 + $0x48] sm:$0xff] %vm1002, %v1840
      %1857 = vst.msk [vmem:[%s1766 + $0x50] sm:$0xff] %vm1002, %v1841
      %1858 = vst.msk [vmem:[%s1766 + $0x58] sm:$0xff] %vm1002, %v1842
      %1859 = vst.msk [vmem:[%s1766 + $0x60] sm:$0xff] %vm1002, %v1843
      %1860 = vst.msk [vmem:[%s1766 + $0x68] sm:$0xff] %vm1002, %v1844
      %1861 = vst.msk [vmem:[%s1766 + $0x70] sm:$0xff] %vm1002, %v1845
      %1862 = vst.msk [vmem:[%s1766 + $0x78] sm:$0xff] %vm1002, %v1846
      %s1863 = scalar_lea.vmem [#allocation4], 128
      %v1864 = vld [vmem:[%s1863] sm:$0xff]
      %v1865 = vld [vmem:[%s1863 + $0x8] sm:$0xff]
      %v1866 = vld [vmem:[%s1863 + $0x10] sm:$0xff]
      %v1867 = vld [vmem:[%s1863 + $0x18] sm:$0xff]
      %v1868 = vld [vmem:[%s1863 + $0x20] sm:$0xff]
      %v1869 = vld [vmem:[%s1863 + $0x28] sm:$0xff]
      %v1870 = vld [vmem:[%s1863 + $0x30] sm:$0xff]
      %v1871 = vld [vmem:[%s1863 + $0x38] sm:$0xff]
      %v1872 = vld [vmem:[%s1863 + $0x40] sm:$0xff]
      %v1873 = vld [vmem:[%s1863 + $0x48] sm:$0xff]
      %v1874 = vld [vmem:[%s1863 + $0x50] sm:$0xff]
      %v1875 = vld [vmem:[%s1863 + $0x58] sm:$0xff]
      %v1876 = vld [vmem:[%s1863 + $0x60] sm:$0xff]
      %v1877 = vld [vmem:[%s1863 + $0x68] sm:$0xff]
      %v1878 = vld [vmem:[%s1863 + $0x70] sm:$0xff]
      %v1879 = vld [vmem:[%s1863 + $0x78] sm:$0xff]
      %1881 = vset.pattern.permute.xlu0 0
      %1882 = vperm.xlu0 %1881, %v1607
      %v1883 = vpop.permute.xlu0 %1882
      %1886 = vset.pattern.permute.xlu0 0
      %1887 = vperm.xlu0 %1886, %v1609
      %v1888 = vpop.permute.xlu0 %1887
      %1891 = vset.pattern.permute.xlu0 0
      %1892 = vperm.xlu0 %1891, %v1611
      %v1893 = vpop.permute.xlu0 %1892
      %1896 = vset.pattern.permute.xlu0 0
      %1897 = vperm.xlu0 %1896, %v1613
      %v1898 = vpop.permute.xlu0 %1897
      %1901 = vset.pattern.permute.xlu0 0
      %1902 = vperm.xlu0 %1901, %v1615
      %v1903 = vpop.permute.xlu0 %1902
      %1906 = vset.pattern.permute.xlu0 0
      %1907 = vperm.xlu0 %1906, %v1617
      %v1908 = vpop.permute.xlu0 %1907
      %1911 = vset.pattern.permute.xlu0 0
      %1912 = vperm.xlu0 %1911, %v1619
      %v1913 = vpop.permute.xlu0 %1912
      %1916 = vset.pattern.permute.xlu0 0
      %1917 = vperm.xlu0 %1916, %v1621
      %v1918 = vpop.permute.xlu0 %1917
      %1921 = vset.pattern.permute.xlu0 0
      %1922 = vperm.xlu0 %1921, %v1623
      %v1923 = vpop.permute.xlu0 %1922
      %1926 = vset.pattern.permute.xlu0 0
      %1927 = vperm.xlu0 %1926, %v1625
      %v1928 = vpop.permute.xlu0 %1927
      %1931 = vset.pattern.permute.xlu0 0
      %1932 = vperm.xlu0 %1931, %v1627
      %v1933 = vpop.permute.xlu0 %1932
      %1936 = vset.pattern.permute.xlu0 0
      %1937 = vperm.xlu0 %1936, %v1629
      %v1938 = vpop.permute.xlu0 %1937
      %1941 = vset.pattern.permute.xlu0 0
      %1942 = vperm.xlu0 %1941, %v1631
      %v1943 = vpop.permute.xlu0 %1942
      %1946 = vset.pattern.permute.xlu0 0
      %1947 = vperm.xlu0 %1946, %v1633
      %v1948 = vpop.permute.xlu0 %1947
      %1951 = vset.pattern.permute.xlu0 0
      %1952 = vperm.xlu0 %1951, %v1635
      %v1953 = vpop.permute.xlu0 %1952
      %1956 = vset.pattern.permute.xlu0 0
      %1957 = vperm.xlu0 %1956, %v1637
      %v1958 = vpop.permute.xlu0 %1957
      %v1960 = vmul.f32 %v1883, %v1864
      %v1961 = vmul.f32 %v1888, %v1865
      %v1962 = vmul.f32 %v1893, %v1866
      %v1963 = vmul.f32 %v1898, %v1867
      %v1964 = vmul.f32 %v1903, %v1868
      %v1965 = vmul.f32 %v1908, %v1869
      %v1966 = vmul.f32 %v1913, %v1870
      %v1967 = vmul.f32 %v1918, %v1871
      %v1968 = vmul.f32 %v1923, %v1872
      %v1969 = vmul.f32 %v1928, %v1873
      %v1970 = vmul.f32 %v1933, %v1874
      %v1971 = vmul.f32 %v1938, %v1875
      %v1972 = vmul.f32 %v1943, %v1876
      %v1973 = vmul.f32 %v1948, %v1877
      %v1974 = vmul.f32 %v1953, %v1878
      %v1975 = vmul.f32 %v1958, %v1879
      %v1976 = vpack.c.bf16 %v1737, %v1735
      %v1977 = vpack.c.bf16 %v1741, %v1739
      %v1978 = vpack.c.bf16 %v1745, %v1743
      %v1979 = vpack.c.bf16 %v1749, %v1747
      %v1980 = vpack.c.bf16 %v1753, %v1751
      %v1981 = vpack.c.bf16 %v1757, %v1755
      %v1982 = vpack.c.bf16 %v1761, %v1759
      %v1983 = vpack.c.bf16 %v1765, %v1763
      %1984 = vrot.lane.b32.xlu0 %v1171, 96
      %v1985 = vpop.permute.xlu0 %1984
      %1986 = vrot.lane.b32.xlu0 %v1172, 96
      %v1987 = vpop.permute.xlu0 %1986
      %1988 = vrot.lane.b32.xlu0 %v1173, 96
      %v1989 = vpop.permute.xlu0 %1988
      %1990 = vrot.lane.b32.xlu0 %v1174, 96
      %v1991 = vpop.permute.xlu0 %1990
      %1992 = vrot.lane.b32.xlu0 %v1175, 96
      %v1993 = vpop.permute.xlu0 %1992
      %1994 = vrot.lane.b32.xlu0 %v1176, 96
      %v1995 = vpop.permute.xlu0 %1994
      %1996 = vrot.lane.b32.xlu0 %v1177, 96
      %v1997 = vpop.permute.xlu0 %1996
      %1998 = vrot.lane.b32.xlu0 %v1178, 96
      %v1999 = vpop.permute.xlu0 %1998
      %2008 = vmatprep.subr.bf16.mxu0 0
      %2009 = vmatpush1.bf16.msra.mxu0 %v1985
      %2010 = vmatprep.subr.bf16.mxu0 0
      %2011 = vmatpush1.bf16.msra.mxu0 %v1987
      %2012 = vmatprep.subr.bf16.mxu0 0
      %2013 = vmatpush1.bf16.msra.mxu0 %v1989
      %2014 = vmatprep.subr.bf16.mxu0 0
      %2015 = vmatpush1.bf16.msra.mxu0 %v1991
      %2016 = vmatprep.subr.bf16.mxu0 0
      %2017 = vmatpush1.bf16.msra.mxu0 %v1993
      %2018 = vmatprep.subr.bf16.mxu0 0
      %2019 = vmatpush1.bf16.msra.mxu0 %v1995
      %2020 = vmatprep.subr.bf16.mxu0 0
      %2021 = vmatpush1.bf16.msra.mxu0 %v1997
      %2022 = vmatprep.subr.bf16.mxu0 0
      %2023 = vmatpush1.bf16.msra.mxu0 %v1999
      %2024 = vmatprep.subr.bf16.mxu0 0
      %2025 = vmatpush1.bf16.msra.mxu0 0
      %2026 = vmatprep.subr.bf16.mxu0 0
      %2027 = vmatpush1.bf16.msra.mxu0 0
      %2028 = vmatprep.subr.bf16.mxu0 0
      %2029 = vmatpush1.bf16.msra.mxu0 0
      %2030 = vmatprep.subr.bf16.mxu0 0
      %2031 = vmatpush1.bf16.msra.mxu0 0
      %2032 = vmatprep.subr.bf16.mxu0 0
      %2033 = vmatpush1.bf16.msra.mxu0 0
      %2034 = vmatprep.subr.bf16.mxu0 0
      %2035 = vmatpush1.bf16.msra.mxu0 0
      %2036 = vmatprep.subr.bf16.mxu0 0
      %2037 = vmatpush1.bf16.msra.mxu0 0
      %2038 = vmatprep.subr.bf16.mxu0 0
      %2039 = vmatpush1.bf16.msra.mxu0 0
      %2040 = vmatprep.mubr.bf16.mxu0 0
      %2041 = vmatmul.mubr.bf16.gmra.mrb[0].mxu0 %v1976
      %v2042 = vpop.f32.mrb[0].mxu0
      %v2043 = vadd.f32 0.0, %v2042
      %v2044 = vpop.f32.mrb[0].mxu0
      %v2045 = vpop.f32.mrb[0].mxu0
      %v2046 = vadd.f32 0.0, %v2045
      %v2047 = vpop.f32.mrb[0].mxu0
      %2048 = vmatprep.mubr.bf16.mxu0 0
      %2049 = vmatmul.mubr.bf16.gmra.mrb[0].mxu0 %v1977
      %v2050 = vpop.f32.mrb[0].mxu0
      %v2051 = vadd.f32 0.0, %v2050
      %v2052 = vpop.f32.mrb[0].mxu0
      %v2053 = vpop.f32.mrb[0].mxu0
      %v2054 = vadd.f32 0.0, %v2053
      %v2055 = vpop.f32.mrb[0].mxu0
      %2056 = vmatprep.mubr.bf16.mxu0 0
      %2057 = vmatmul.mubr.bf16.gmra.mrb[0].mxu0 %v1978
      %v2058 = vpop.f32.mrb[0].mxu0
      %v2059 = vadd.f32 0.0, %v2058
      %v2060 = vpop.f32.mrb[0].mxu0
      %v2061 = vpop.f32.mrb[0].mxu0
      %v2062 = vadd.f32 0.0, %v2061
      %v2063 = vpop.f32.mrb[0].mxu0
      %2064 = vmatprep.mubr.bf16.mxu0 0
      %2065 = vmatmul.mubr.bf16.gmra.mrb[0].mxu0 %v1979
      %v2066 = vpop.f32.mrb[0].mxu0
      %v2067 = vadd.f32 0.0, %v2066
      %v2068 = vpop.f32.mrb[0].mxu0
      %v2069 = vpop.f32.mrb[0].mxu0
      %v2070 = vadd.f32 0.0, %v2069
      %v2071 = vpop.f32.mrb[0].mxu0
      %2072 = vmatprep.mubr.bf16.mxu0 0
      %2073 = vmatmul.mubr.bf16.gmra.mrb[0].mxu0 %v1980
      %v2074 = vpop.f32.mrb[0].mxu0
      %v2075 = vadd.f32 0.0, %v2074
      %v2076 = vpop.f32.mrb[0].mxu0
      %v2077 = vpop.f32.mrb[0].mxu0
      %v2078 = vadd.f32 0.0, %v2077
      %v2079 = vpop.f32.mrb[0].mxu0
      %2080 = vmatprep.mubr.bf16.mxu0 0
      %2081 = vmatmul.mubr.bf16.gmra.mrb[0].mxu0 %v1981
      %v2082 = vpop.f32.mrb[0].mxu0
      %v2083 = vadd.f32 0.0, %v2082
      %v2084 = vpop.f32.mrb[0].mxu0
      %v2085 = vpop.f32.mrb[0].mxu0
      %v2086 = vadd.f32 0.0, %v2085
      %v2087 = vpop.f32.mrb[0].mxu0
      %2088 = vmatprep.mubr.bf16.mxu0 0
      %2089 = vmatmul.mubr.bf16.gmra.mrb[0].mxu0 %v1982
      %v2090 = vpop.f32.mrb[0].mxu0
      %v2091 = vadd.f32 0.0, %v2090
      %v2092 = vpop.f32.mrb[0].mxu0
      %v2093 = vpop.f32.mrb[0].mxu0
      %v2094 = vadd.f32 0.0, %v2093
      %v2095 = vpop.f32.mrb[0].mxu0
      %2096 = vmatprep.mubr.bf16.mxu0 0
      %2097 = vmatmul.mubr.bf16.gmra.mrb[0].mxu0 %v1983
      %v2098 = vpop.f32.mrb[0].mxu0
      %v2099 = vadd.f32 0.0, %v2098
      %v2100 = vpop.f32.mrb[0].mxu0
      %v2101 = vpop.f32.mrb[0].mxu0
      %v2102 = vadd.f32 0.0, %v2101
      %v2103 = vpop.f32.mrb[0].mxu0
      %2104 = vdwg.mxu0
      %v2105 = vadd.f32 %v1960, %v2043
      %v2106 = vadd.f32 %v1961, %v2046
      %v2107 = vadd.f32 %v1962, %v2051
      %v2108 = vadd.f32 %v1963, %v2054
      %v2109 = vadd.f32 %v1964, %v2059
      %v2110 = vadd.f32 %v1965, %v2062
      %v2111 = vadd.f32 %v1966, %v2067
      %v2112 = vadd.f32 %v1967, %v2070
      %v2113 = vadd.f32 %v1968, %v2075
      %v2114 = vadd.f32 %v1969, %v2078
      %v2115 = vadd.f32 %v1970, %v2083
      %v2116 = vadd.f32 %v1971, %v2086
      %v2117 = vadd.f32 %v1972, %v2091
      %v2118 = vadd.f32 %v1973, %v2094
      %v2119 = vadd.f32 %v1974, %v2099
      %v2120 = vadd.f32 %v1975, %v2102
      %2121 = vst.msk [vmem:[%s1863] sm:$0xff] %vm520, %v2105
      %2122 = vst.msk [vmem:[%s1863 + $0x8] sm:$0xff] %vm520, %v2106
      %2123 = vst.msk [vmem:[%s1863 + $0x10] sm:$0xff] %vm520, %v2107
      %2124 = vst.msk [vmem:[%s1863 + $0x18] sm:$0xff] %vm520, %v2108
      %2125 = vst.msk [vmem:[%s1863 + $0x20] sm:$0xff] %vm520, %v2109
      %2126 = vst.msk [vmem:[%s1863 + $0x28] sm:$0xff] %vm520, %v2110
      %2127 = vst.msk [vmem:[%s1863 + $0x30] sm:$0xff] %vm520, %v2111
      %2128 = vst.msk [vmem:[%s1863 + $0x38] sm:$0xff] %vm520, %v2112
      %2129 = vst.msk [vmem:[%s1863 + $0x40] sm:$0xff] %vm520, %v2113
      %2130 = vst.msk [vmem:[%s1863 + $0x48] sm:$0xff] %vm520, %v2114
      %2131 = vst.msk [vmem:[%s1863 + $0x50] sm:$0xff] %vm520, %v2115
      %2132 = vst.msk [vmem:[%s1863 + $0x58] sm:$0xff] %vm520, %v2116
      %2133 = vst.msk [vmem:[%s1863 + $0x60] sm:$0xff] %vm520, %v2117
      %2134 = vst.msk [vmem:[%s1863 + $0x68] sm:$0xff] %vm520, %v2118
      %2135 = vst.msk [vmem:[%s1863 + $0x70] sm:$0xff] %vm520, %v2119
      %2136 = vst.msk [vmem:[%s1863 + $0x78] sm:$0xff] %vm520, %v2120
      %2137 = vst.msk [vmem:[%s1525] sm:$0xff] %vm1002, %v1574
      %2138 = vst.msk [vmem:[%s1525 + $0x8] sm:$0xff] %vm1002, %v1575
      %2139 = vst.msk [vmem:[%s1525 + $0x10] sm:$0xff] %vm1002, %v1576
      %2140 = vst.msk [vmem:[%s1525 + $0x18] sm:$0xff] %vm1002, %v1577
      %2141 = vst.msk [vmem:[%s1525 + $0x20] sm:$0xff] %vm1002, %v1578
      %2142 = vst.msk [vmem:[%s1525 + $0x28] sm:$0xff] %vm1002, %v1579
      %2143 = vst.msk [vmem:[%s1525 + $0x30] sm:$0xff] %vm1002, %v1580
      %2144 = vst.msk [vmem:[%s1525 + $0x38] sm:$0xff] %vm1002, %v1581
      %2145 = vst.msk [vmem:[%s1525 + $0x40] sm:$0xff] %vm1002, %v1582
      %2146 = vst.msk [vmem:[%s1525 + $0x48] sm:$0xff] %vm1002, %v1583
      %2147 = vst.msk [vmem:[%s1525 + $0x50] sm:$0xff] %vm1002, %v1584
      %2148 = vst.msk [vmem:[%s1525 + $0x58] sm:$0xff] %vm1002, %v1585
      %2149 = vst.msk [vmem:[%s1525 + $0x60] sm:$0xff] %vm1002, %v1586
      %2150 = vst.msk [vmem:[%s1525 + $0x68] sm:$0xff] %vm1002, %v1587
      %2151 = vst.msk [vmem:[%s1525 + $0x70] sm:$0xff] %vm1002, %v1588
      %2152 = vst.msk [vmem:[%s1525 + $0x78] sm:$0xff] %vm1002, %v1589
      // Predicated region
      $region37: #{tpu_custom_call.1} parent=31 // pred_check
        %p2153 = pneg %p290
      $region38: #{tpu_custom_call.1} parent=31 // pred_check_branch
        %2155 = sbr.rel (%p2153) target = $region40
      $region39: #{tpu_custom_call.1} parent=31 // pred_region
        %v2156 = vld [vmem:[#allocation3] sm:$0xff]
        %v2157 = vld [vmem:[#allocation3 + $0x8] sm:$0xff]
        %v2158 = vld [vmem:[#allocation3 + $0x10] sm:$0xff]
        %v2159 = vld [vmem:[#allocation3 + $0x18] sm:$0xff]
        %v2160 = vld [vmem:[#allocation3 + $0x20] sm:$0xff]
        %v2161 = vld [vmem:[#allocation3 + $0x28] sm:$0xff]
        %v2162 = vld [vmem:[#allocation3 + $0x30] sm:$0xff]
        %v2163 = vld [vmem:[#allocation3 + $0x38] sm:$0xff]
        %v2164 = vld [vmem:[#allocation3 + $0x40] sm:$0xff]
        %v2165 = vld [vmem:[#allocation3 + $0x48] sm:$0xff]
        %v2166 = vld [vmem:[#allocation3 + $0x50] sm:$0xff]
        %v2167 = vld [vmem:[#allocation3 + $0x58] sm:$0xff]
        %v2168 = vld [vmem:[#allocation3 + $0x60] sm:$0xff]
        %v2169 = vld [vmem:[#allocation3 + $0x68] sm:$0xff]
        %v2170 = vld [vmem:[#allocation3 + $0x70] sm:$0xff]
        %v2171 = vld [vmem:[#allocation3 + $0x78] sm:$0xff]
        %v2172 = vrcp.pop %v2156
        %v2173 = vrcp.pop %v2157
        %v2174 = vrcp.pop %v2158
        %v2175 = vrcp.pop %v2159
        %v2176 = vrcp.pop %v2160
        %v2177 = vrcp.pop %v2161
        %v2178 = vrcp.pop %v2162
        %v2179 = vrcp.pop %v2163
        %v2180 = vrcp.pop %v2164
        %v2181 = vrcp.pop %v2165
        %v2182 = vrcp.pop %v2166
        %v2183 = vrcp.pop %v2167
        %v2184 = vrcp.pop %v2168
        %v2185 = vrcp.pop %v2169
        %v2186 = vrcp.pop %v2170
        %v2187 = vrcp.pop %v2171
        %v2188 = vld [vmem:[#allocation4] sm:$0xff]
        %v2189 = vld [vmem:[#allocation4 + $0x8] sm:$0xff]
        %v2190 = vld [vmem:[#allocation4 + $0x10] sm:$0xff]
        %v2191 = vld [vmem:[#allocation4 + $0x18] sm:$0xff]
        %v2192 = vld [vmem:[#allocation4 + $0x20] sm:$0xff]
        %v2193 = vld [vmem:[#allocation4 + $0x28] sm:$0xff]
        %v2194 = vld [vmem:[#allocation4 + $0x30] sm:$0xff]
        %v2195 = vld [vmem:[#allocation4 + $0x38] sm:$0xff]
        %v2196 = vld [vmem:[#allocation4 + $0x40] sm:$0xff]
        %v2197 = vld [vmem:[#allocation4 + $0x48] sm:$0xff]
        %v2198 = vld [vmem:[#allocation4 + $0x50] sm:$0xff]
        %v2199 = vld [vmem:[#allocation4 + $0x58] sm:$0xff]
        %v2200 = vld [vmem:[#allocation4 + $0x60] sm:$0xff]
        %v2201 = vld [vmem:[#allocation4 + $0x68] sm:$0xff]
        %v2202 = vld [vmem:[#allocation4 + $0x70] sm:$0xff]
        %v2203 = vld [vmem:[#allocation4 + $0x78] sm:$0xff]
        %2205 = vset.pattern.permute.xlu0 0
        %2206 = vperm.xlu0 %2205, %v2172
        %v2207 = vpop.permute.xlu0 %2206
        %2210 = vset.pattern.permute.xlu0 0
        %2211 = vperm.xlu0 %2210, %v2173
        %v2212 = vpop.permute.xlu0 %2211
        %2215 = vset.pattern.permute.xlu0 0
        %2216 = vperm.xlu0 %2215, %v2174
        %v2217 = vpop.permute.xlu0 %2216
        %2220 = vset.pattern.permute.xlu0 0
        %2221 = vperm.xlu0 %2220, %v2175
        %v2222 = vpop.permute.xlu0 %2221
        %2225 = vset.pattern.permute.xlu0 0
        %2226 = vperm.xlu0 %2225, %v2176
        %v2227 = vpop.permute.xlu0 %2226
        %2230 = vset.pattern.permute.xlu0 0
        %2231 = vperm.xlu0 %2230, %v2177
        %v2232 = vpop.permute.xlu0 %2231
        %2235 = vset.pattern.permute.xlu0 0
        %2236 = vperm.xlu0 %2235, %v2178
        %v2237 = vpop.permute.xlu0 %2236
        %2240 = vset.pattern.permute.xlu0 0
        %2241 = vperm.xlu0 %2240, %v2179
        %v2242 = vpop.permute.xlu0 %2241
        %2245 = vset.pattern.permute.xlu0 0
        %2246 = vperm.xlu0 %2245, %v2180
        %v2247 = vpop.permute.xlu0 %2246
        %2250 = vset.pattern.permute.xlu0 0
        %2251 = vperm.xlu0 %2250, %v2181
        %v2252 = vpop.permute.xlu0 %2251
        %2255 = vset.pattern.permute.xlu0 0
        %2256 = vperm.xlu0 %2255, %v2182
        %v2257 = vpop.permute.xlu0 %2256
        %2260 = vset.pattern.permute.xlu0 0
        %2261 = vperm.xlu0 %2260, %v2183
        %v2262 = vpop.permute.xlu0 %2261
        %2265 = vset.pattern.permute.xlu0 0
        %2266 = vperm.xlu0 %2265, %v2184
        %v2267 = vpop.permute.xlu0 %2266
        %2270 = vset.pattern.permute.xlu0 0
        %2271 = vperm.xlu0 %2270, %v2185
        %v2272 = vpop.permute.xlu0 %2271
        %2275 = vset.pattern.permute.xlu0 0
        %2276 = vperm.xlu0 %2275, %v2186
        %v2277 = vpop.permute.xlu0 %2276
        %2280 = vset.pattern.permute.xlu0 0
        %2281 = vperm.xlu0 %2280, %v2187
        %v2282 = vpop.permute.xlu0 %2281
        %v2284 = vmul.f32 %v2188, %v2207
        %v2285 = vmul.f32 %v2189, %v2212
        %v2286 = vmul.f32 %v2190, %v2217
        %v2287 = vmul.f32 %v2191, %v2222
        %v2288 = vmul.f32 %v2192, %v2227
        %v2289 = vmul.f32 %v2193, %v2232
        %v2290 = vmul.f32 %v2194, %v2237
        %v2291 = vmul.f32 %v2195, %v2242
        %v2292 = vmul.f32 %v2196, %v2247
        %v2293 = vmul.f32 %v2197, %v2252
        %v2294 = vmul.f32 %v2198, %v2257
        %v2295 = vmul.f32 %v2199, %v2262
        %v2296 = vmul.f32 %v2200, %v2267
        %v2297 = vmul.f32 %v2201, %v2272
        %v2298 = vmul.f32 %v2202, %v2277
        %v2299 = vmul.f32 %v2203, %v2282
        %v2300 = vpack.c.bf16 %v2285, %v2284
        %v2301 = vpack.c.bf16 %v2287, %v2286
        %v2302 = vpack.c.bf16 %v2289, %v2288
        %v2303 = vpack.c.bf16 %v2291, %v2290
        %v2304 = vpack.c.bf16 %v2293, %v2292
        %v2305 = vpack.c.bf16 %v2295, %v2294
        %v2306 = vpack.c.bf16 %v2297, %v2296
        %v2307 = vpack.c.bf16 %v2299, %v2298
        %v2316 = vunpack.c.l.b16 %v2300
        %v2317 = vunpack.c.h.b16 %v2300
        %v2318 = vunpack.c.l.b16 %v2301
        %v2319 = vunpack.c.h.b16 %v2301
        %v2320 = vunpack.c.l.b16 %v2302
        %v2321 = vunpack.c.h.b16 %v2302
        %v2322 = vunpack.c.l.b16 %v2303
        %v2323 = vunpack.c.h.b16 %v2303
        %v2324 = vunpack.c.l.b16 %v2304
        %v2325 = vunpack.c.h.b16 %v2304
        %v2326 = vunpack.c.l.b16 %v2305
        %v2327 = vunpack.c.h.b16 %v2305
        %v2328 = vunpack.c.l.b16 %v2306
        %v2329 = vunpack.c.h.b16 %v2306
        %v2330 = vunpack.c.l.b16 %v2307
        %v2331 = vunpack.c.h.b16 %v2307
        %v2332 = vpack.c.b16 %v2316, %v2316
        %v2333 = vpack.c.b16 %v2317, %v2317
        %v2334 = vpack.c.b16 %v2318, %v2318
        %v2335 = vpack.c.b16 %v2319, %v2319
        %v2336 = vpack.c.b16 %v2320, %v2320
        %v2337 = vpack.c.b16 %v2321, %v2321
        %v2338 = vpack.c.b16 %v2322, %v2322
        %v2339 = vpack.c.b16 %v2323, %v2323
        %v2340 = vpack.c.b16 %v2324, %v2324
        %v2341 = vpack.c.b16 %v2325, %v2325
        %v2342 = vpack.c.b16 %v2326, %v2326
        %v2343 = vpack.c.b16 %v2327, %v2327
        %v2344 = vpack.c.b16 %v2328, %v2328
        %v2345 = vpack.c.b16 %v2329, %v2329
        %v2346 = vpack.c.b16 %v2330, %v2330
        %v2347 = vpack.c.b16 %v2331, %v2331
        %vm2364 = vcmask 257024
        %2365 = vst.msk [vmem:[%s287] sm:$0xf] %vm2364, %v2332
        %2366 = vst.msk [vmem:[%s287 + $0x4] sm:$0xf] %vm2364, %v2333
        %2367 = vst.msk [vmem:[%s287 + $0x8] sm:$0xf] %vm2364, %v2334
        %2368 = vst.msk [vmem:[%s287 + $0xc] sm:$0xf] %vm2364, %v2335
        %2369 = vst.msk [vmem:[%s287 + $0x10] sm:$0xf] %vm2364, %v2336
        %2370 = vst.msk [vmem:[%s287 + $0x14] sm:$0xf] %vm2364, %v2337
        %2371 = vst.msk [vmem:[%s287 + $0x18] sm:$0xf] %vm2364, %v2338
        %2372 = vst.msk [vmem:[%s287 + $0x1c] sm:$0xf] %vm2364, %v2339
        %2373 = vst.msk [vmem:[%s287 + $0x20] sm:$0xf] %vm2364, %v2340
        %2374 = vst.msk [vmem:[%s287 + $0x24] sm:$0xf] %vm2364, %v2341
        %2375 = vst.msk [vmem:[%s287 + $0x28] sm:$0xf] %vm2364, %v2342
        %2376 = vst.msk [vmem:[%s287 + $0x2c] sm:$0xf] %vm2364, %v2343
        %2377 = vst.msk [vmem:[%s287 + $0x30] sm:$0xf] %vm2364, %v2344
        %2378 = vst.msk [vmem:[%s287 + $0x34] sm:$0xf] %vm2364, %v2345
        %2379 = vst.msk [vmem:[%s287 + $0x38] sm:$0xf] %vm2364, %v2346
        %2380 = vst.msk [vmem:[%s287 + $0x3c] sm:$0xf] %vm2364, %v2347
        %v2381 = vld [vmem:[%s1766] sm:$0xff]
        %v2382 = vld [vmem:[%s1766 + $0x8] sm:$0xff]
        %v2383 = vld [vmem:[%s1766 + $0x10] sm:$0xff]
        %v2384 = vld [vmem:[%s1766 + $0x18] sm:$0xff]
        %v2385 = vld [vmem:[%s1766 + $0x20] sm:$0xff]
        %v2386 = vld [vmem:[%s1766 + $0x28] sm:$0xff]
        %v2387 = vld [vmem:[%s1766 + $0x30] sm:$0xff]
        %v2388 = vld [vmem:[%s1766 + $0x38] sm:$0xff]
        %v2389 = vld [vmem:[%s1766 + $0x40] sm:$0xff]
        %v2390 = vld [vmem:[%s1766 + $0x48] sm:$0xff]
        %v2391 = vld [vmem:[%s1766 + $0x50] sm:$0xff]
        %v2392 = vld [vmem:[%s1766 + $0x58] sm:$0xff]
        %v2393 = vld [vmem:[%s1766 + $0x60] sm:$0xff]
        %v2394 = vld [vmem:[%s1766 + $0x68] sm:$0xff]
        %v2395 = vld [vmem:[%s1766 + $0x70] sm:$0xff]
        %v2396 = vld [vmem:[%s1766 + $0x78] sm:$0xff]
        %v2397 = vrcp.pop %v2381
        %v2398 = vrcp.pop %v2382
        %v2399 = vrcp.pop %v2383
        %v2400 = vrcp.pop %v2384
        %v2401 = vrcp.pop %v2385
        %v2402 = vrcp.pop %v2386
        %v2403 = vrcp.pop %v2387
        %v2404 = vrcp.pop %v2388
        %v2405 = vrcp.pop %v2389
        %v2406 = vrcp.pop %v2390
        %v2407 = vrcp.pop %v2391
        %v2408 = vrcp.pop %v2392
        %v2409 = vrcp.pop %v2393
        %v2410 = vrcp.pop %v2394
        %v2411 = vrcp.pop %v2395
        %v2412 = vrcp.pop %v2396
        %v2413 = vld [vmem:[%s1863] sm:$0xff]
        %v2414 = vld [vmem:[%s1863 + $0x8] sm:$0xff]
        %v2415 = vld [vmem:[%s1863 + $0x10] sm:$0xff]
        %v2416 = vld [vmem:[%s1863 + $0x18] sm:$0xff]
        %v2417 = vld [vmem:[%s1863 + $0x20] sm:$0xff]
        %v2418 = vld [vmem:[%s1863 + $0x28] sm:$0xff]
        %v2419 = vld [vmem:[%s1863 + $0x30] sm:$0xff]
        %v2420 = vld [vmem:[%s1863 + $0x38] sm:$0xff]
        %v2421 = vld [vmem:[%s1863 + $0x40] sm:$0xff]
        %v2422 = vld [vmem:[%s1863 + $0x48] sm:$0xff]
        %v2423 = vld [vmem:[%s1863 + $0x50] sm:$0xff]
        %v2424 = vld [vmem:[%s1863 + $0x58] sm:$0xff]
        %v2425 = vld [vmem:[%s1863 + $0x60] sm:$0xff]
        %v2426 = vld [vmem:[%s1863 + $0x68] sm:$0xff]
        %v2427 = vld [vmem:[%s1863 + $0x70] sm:$0xff]
        %v2428 = vld [vmem:[%s1863 + $0x78] sm:$0xff]
        %2430 = vset.pattern.permute.xlu0 0
        %2431 = vperm.xlu0 %2430, %v2397
        %v2432 = vpop.permute.xlu0 %2431
        %2435 = vset.pattern.permute.xlu0 0
        %2436 = vperm.xlu0 %2435, %v2398
        %v2437 = vpop.permute.xlu0 %2436
        %2440 = vset.pattern.permute.xlu0 0
        %2441 = vperm.xlu0 %2440, %v2399
        %v2442 = vpop.permute.xlu0 %2441
        %2445 = vset.pattern.permute.xlu0 0
        %2446 = vperm.xlu0 %2445, %v2400
        %v2447 = vpop.permute.xlu0 %2446
        %2450 = vset.pattern.permute.xlu0 0
        %2451 = vperm.xlu0 %2450, %v2401
        %v2452 = vpop.permute.xlu0 %2451
        %2455 = vset.pattern.permute.xlu0 0
        %2456 = vperm.xlu0 %2455, %v2402
        %v2457 = vpop.permute.xlu0 %2456
        %2460 = vset.pattern.permute.xlu0 0
        %2461 = vperm.xlu0 %2460, %v2403
        %v2462 = vpop.permute.xlu0 %2461
        %2465 = vset.pattern.permute.xlu0 0
        %2466 = vperm.xlu0 %2465, %v2404
        %v2467 = vpop.permute.xlu0 %2466
        %2470 = vset.pattern.permute.xlu0 0
        %2471 = vperm.xlu0 %2470, %v2405
        %v2472 = vpop.permute.xlu0 %2471
        %2475 = vset.pattern.permute.xlu0 0
        %2476 = vperm.xlu0 %2475, %v2406
        %v2477 = vpop.permute.xlu0 %2476
        %2480 = vset.pattern.permute.xlu0 0
        %2481 = vperm.xlu0 %2480, %v2407
        %v2482 = vpop.permute.xlu0 %2481
        %2485 = vset.pattern.permute.xlu0 0
        %2486 = vperm.xlu0 %2485, %v2408
        %v2487 = vpop.permute.xlu0 %2486
        %2490 = vset.pattern.permute.xlu0 0
        %2491 = vperm.xlu0 %2490, %v2409
        %v2492 = vpop.permute.xlu0 %2491
        %2495 = vset.pattern.permute.xlu0 0
        %2496 = vperm.xlu0 %2495, %v2410
        %v2497 = vpop.permute.xlu0 %2496
        %2500 = vset.pattern.permute.xlu0 0
        %2501 = vperm.xlu0 %2500, %v2411
        %v2502 = vpop.permute.xlu0 %2501
        %2505 = vset.pattern.permute.xlu0 0
        %2506 = vperm.xlu0 %2505, %v2412
        %v2507 = vpop.permute.xlu0 %2506
        %v2509 = vmul.f32 %v2413, %v2432
        %v2510 = vmul.f32 %v2414, %v2437
        %v2511 = vmul.f32 %v2415, %v2442
        %v2512 = vmul.f32 %v2416, %v2447
        %v2513 = vmul.f32 %v2417, %v2452
        %v2514 = vmul.f32 %v2418, %v2457
        %v2515 = vmul.f32 %v2419, %v2462
        %v2516 = vmul.f32 %v2420, %v2467
        %v2517 = vmul.f32 %v2421, %v2472
        %v2518 = vmul.f32 %v2422, %v2477
        %v2519 = vmul.f32 %v2423, %v2482
        %v2520 = vmul.f32 %v2424, %v2487
        %v2521 = vmul.f32 %v2425, %v2492
        %v2522 = vmul.f32 %v2426, %v2497
        %v2523 = vmul.f32 %v2427, %v2502
        %v2524 = vmul.f32 %v2428, %v2507
        %v2525 = vpack.c.bf16 %v2510, %v2509
        %v2526 = vpack.c.bf16 %v2512, %v2511
        %v2527 = vpack.c.bf16 %v2514, %v2513
        %v2528 = vpack.c.bf16 %v2516, %v2515
        %v2529 = vpack.c.bf16 %v2518, %v2517
        %v2530 = vpack.c.bf16 %v2520, %v2519
        %v2531 = vpack.c.bf16 %v2522, %v2521
        %v2532 = vpack.c.bf16 %v2524, %v2523
        %v2541 = vunpack.c.l.b16 %v2525
        %v2542 = vunpack.c.h.b16 %v2525
        %v2543 = vunpack.c.l.b16 %v2526
        %v2544 = vunpack.c.h.b16 %v2526
        %v2545 = vunpack.c.l.b16 %v2527
        %v2546 = vunpack.c.h.b16 %v2527
        %v2547 = vunpack.c.l.b16 %v2528
        %v2548 = vunpack.c.h.b16 %v2528
        %v2549 = vunpack.c.l.b16 %v2529
        %v2550 = vunpack.c.h.b16 %v2529
        %v2551 = vunpack.c.l.b16 %v2530
        %v2552 = vunpack.c.h.b16 %v2530
        %v2553 = vunpack.c.l.b16 %v2531
        %v2554 = vunpack.c.h.b16 %v2531
        %v2555 = vunpack.c.l.b16 %v2532
        %v2556 = vunpack.c.h.b16 %v2532
        %v2557 = vpack.c.b16 %v2541, %v2541
        %v2558 = vpack.c.b16 %v2542, %v2542
        %v2559 = vpack.c.b16 %v2543, %v2543
        %v2560 = vpack.c.b16 %v2544, %v2544
        %v2561 = vpack.c.b16 %v2545, %v2545
        %v2562 = vpack.c.b16 %v2546, %v2546
        %v2563 = vpack.c.b16 %v2547, %v2547
        %v2564 = vpack.c.b16 %v2548, %v2548
        %v2565 = vpack.c.b16 %v2549, %v2549
        %v2566 = vpack.c.b16 %v2550, %v2550
        %v2567 = vpack.c.b16 %v2551, %v2551
        %v2568 = vpack.c.b16 %v2552, %v2552
        %v2569 = vpack.c.b16 %v2553, %v2553
        %v2570 = vpack.c.b16 %v2554, %v2554
        %v2571 = vpack.c.b16 %v2555, %v2555
        %v2572 = vpack.c.b16 %v2556, %v2556
        %2573 = vrot.lane.b32.xlu0 %v2557, 32
        %v2574 = vpop.permute.xlu0 %2573
        %2575 = vrot.lane.b32.xlu0 %v2558, 32
        %v2576 = vpop.permute.xlu0 %2575
        %2577 = vrot.lane.b32.xlu0 %v2559, 32
        %v2578 = vpop.permute.xlu0 %2577
        %2579 = vrot.lane.b32.xlu0 %v2560, 32
        %v2580 = vpop.permute.xlu0 %2579
        %2581 = vrot.lane.b32.xlu0 %v2561, 32
        %v2582 = vpop.permute.xlu0 %2581
        %2583 = vrot.lane.b32.xlu0 %v2562, 32
        %v2584 = vpop.permute.xlu0 %2583
        %2585 = vrot.lane.b32.xlu0 %v2563, 32
        %v2586 = vpop.permute.xlu0 %2585
        %2587 = vrot.lane.b32.xlu0 %v2564, 32
        %v2588 = vpop.permute.xlu0 %2587
        %2589 = vrot.lane.b32.xlu0 %v2565, 32
        %v2590 = vpop.permute.xlu0 %2589
        %2591 = vrot.lane.b32.xlu0 %v2566, 32
        %v2592 = vpop.permute.xlu0 %2591
        %2593 = vrot.lane.b32.xlu0 %v2567, 32
        %v2594 = vpop.permute.xlu0 %2593
        %2595 = vrot.lane.b32.xlu0 %v2568, 32
        %v2596 = vpop.permute.xlu0 %2595
        %2597 = vrot.lane.b32.xlu0 %v2569, 32
        %v2598 = vpop.permute.xlu0 %2597
        %2599 = vrot.lane.b32.xlu0 %v2570, 32
        %v2600 = vpop.permute.xlu0 %2599
        %2601 = vrot.lane.b32.xlu0 %v2571, 32
        %v2602 = vpop.permute.xlu0 %2601
        %2603 = vrot.lane.b32.xlu0 %v2572, 32
        %v2604 = vpop.permute.xlu0 %2603
        %vm2621 = vcmask 519424
        %2622 = vst.msk [vmem:[%s287] sm:$0xf] %vm2621, %v2574
        %2623 = vst.msk [vmem:[%s287 + $0x4] sm:$0xf] %vm2621, %v2576
        %2624 = vst.msk [vmem:[%s287 + $0x8] sm:$0xf] %vm2621, %v2578
        %2625 = vst.msk [vmem:[%s287 + $0xc] sm:$0xf] %vm2621, %v2580
        %2626 = vst.msk [vmem:[%s287 + $0x10] sm:$0xf] %vm2621, %v2582
        %2627 = vst.msk [vmem:[%s287 + $0x14] sm:$0xf] %vm2621, %v2584
        %2628 = vst.msk [vmem:[%s287 + $0x18] sm:$0xf] %vm2621, %v2586
        %2629 = vst.msk [vmem:[%s287 + $0x1c] sm:$0xf] %vm2621, %v2588
        %2630 = vst.msk [vmem:[%s287 + $0x20] sm:$0xf] %vm2621, %v2590
        %2631 = vst.msk [vmem:[%s287 + $0x24] sm:$0xf] %vm2621, %v2592
        %2632 = vst.msk [vmem:[%s287 + $0x28] sm:$0xf] %vm2621, %v2594
        %2633 = vst.msk [vmem:[%s287 + $0x2c] sm:$0xf] %vm2621, %v2596
        %2634 = vst.msk [vmem:[%s287 + $0x30] sm:$0xf] %vm2621, %v2598
        %2635 = vst.msk [vmem:[%s287 + $0x34] sm:$0xf] %vm2621, %v2600
        %2636 = vst.msk [vmem:[%s287 + $0x38] sm:$0xf] %vm2621, %v2602
        %2637 = vst.msk [vmem:[%s287 + $0x3c] sm:$0xf] %vm2621, %v2604
      $region40: #{tpu_custom_call.1} parent=31 // pred_fallthru
        _
      %s2638 = smul.u32 16, %s20
      %p2639 = scmp.lt.s32.totalorder %s19, 1
      %s2640 = scalar_select %p2639, %s19, 1
      %p2641 = scmp.lt.s32.totalorder %s2638, 15
      %s2642 = scalar_select %p2641, %s2638, 15
      %s2643 = smul.addr %s2640, 16
      %s2644 = sadd.s32 %s2642, %s2643
      %s2645 = smul.addr %s2644, 4
      %s2646 = scalar_lea.vmem %s3, %s2645
      // Predicated region
      $region41: #{tpu_custom_call.1} parent=31 // pred_check
        %p2647 = pneg %p137
      $region42: #{tpu_custom_call.1} parent=31 // pred_check_branch
        %2649 = sbr.rel (%p2647) target = $region44
      $region43: #{tpu_custom_call.1} parent=31 // pred_region
        %s2650 = smul.u32 16, %s20
      $region44: #{tpu_custom_call.1} parent=31 // pred_fallthru
        _
    $region32: #{tpu_custom_call.1} parent=5 // pred_fallthru
      _
    %p2651 = scmp.le.s32.totalorder 2, %s9
    // Predicated region
    $region45: #{tpu_custom_call.1} parent=5 // pred_check
      %p2652 = pneg %p2651
    $region46: #{tpu_custom_call.1} parent=5 // pred_check_branch
      %2654 = sbr.rel (%p2652) target = $region48
    $region47: #{tpu_custom_call.1} parent=5 // pred_region
      %s2655 = ssub.s32 %s9, 2
      // Predicated region
      $region49: #{tpu_custom_call.1} parent=47 // pred_check
        %p2656 = pneg %p143
      $region50: #{tpu_custom_call.1} parent=47 // pred_check_branch
        %2658 = sbr.rel (%p2656) target = $region52
      $region51: #{tpu_custom_call.1} parent=47 // pred_region
        %s2659 = smul.u32 16, %s23
        %p2660 = scmp.lt.s32.totalorder %s22, 1
        %s2661 = scalar_select %p2660, %s22, 1
        %p2662 = scmp.lt.s32.totalorder %s2659, 15
        %s2663 = scalar_select %p2662, %s2659, 15
        %s2664 = smul.addr %s2661, 16
        %s2665 = sadd.s32 %s2663, %s2664
        %s2666 = smul.addr %s2665, 4
        %s2667 = scalar_lea.vmem %s3, %s2666
      $region52: #{tpu_custom_call.1} parent=47 // pred_fallthru
        _
    $region48: #{tpu_custom_call.1} parent=5 // pred_fallthru
      _
  $region6: #{tpu_custom_call.1} parent=0 // loop_footer
    %s13 = sadd.s32 1, %s9
  $region7: #{tpu_custom_call.1} parent=0 // loop_footer_branch
    %8 = sbr.rel target = $region3
  $region8: #{tpu_custom_call.1} parent=0 // loop_exit
    _

</llo_original>
